<compile_context>
chip_gen: v7x
topology: tpu7x:2x2x1
jax: 0.10.0
libtpu: 0.0.40
codegen_flags: <defaults>
</compile_context>

<pallas_src>
import functools
import numpy as np
import jax
import jax.numpy as jnp
from jax.experimental import pallas as pl
from jax.experimental.pallas import tpu as pltpu

_F32 = jnp.float32
_BF16 = jnp.bfloat16


def _layer_norm(x, g, b, eps):
    m = jnp.mean(x, axis=-1, keepdims=True)
    c = x - m
    var = jnp.mean(c * c, axis=-1, keepdims=True)
    return c * jax.lax.rsqrt(var + eps) * g + b


# -----------------------------------------------------------------------------
# Fused kernel: QKV proj -> attention (all heads) -> FC + LN1 -> pad -> FFN + LN2 -> pad
# -----------------------------------------------------------------------------
def fused_decoder_kernel(*refs, n_head, d_k, d_v, eps, has_mask, has_attn):
    n_out = 2 if has_attn else 1
    ins, outs = refs[:-n_out], refs[-n_out:]
    if has_mask:
        q_ref, k_ref, mask_ref, pad_ref = ins[:4]
        w = ins[4:]
    else:
        q_ref, k_ref, pad_ref = ins[:3]
        mask_ref = None
        w = ins[3:]
    (wq_t_ref, bq_ref, wkv_t_ref, bkv_ref, fc_w3_ref, fc_b_ref,
     ln1_g_ref, ln1_b_ref, w1_t_ref, b1_ref, w2_t_ref, b2_ref,
     ln2_g_ref, ln2_b_ref) = w
    out_ref = outs[0]
    attn_ref = outs[1] if has_attn else None

    bb, n_q, d_model = q_ref.shape
    n_k = k_ref.shape[1]

    # ---- fused projections: batch folded into sublanes; K and V fused ------------
    x_q = q_ref[...].reshape(bb * n_q, d_model)          # f32, also the residual
    x_k = k_ref[...].reshape(bb * n_k, d_model)
    qp = (jnp.dot(x_q.astype(_BF16), wq_t_ref[...],
                  preferred_element_type=_F32) + bq_ref[...])       # 1/temp pre-folded
    kvp = (jnp.dot(x_k.astype(_BF16), wkv_t_ref[...],
                   preferred_element_type=_F32) + bkv_ref[...])     # [K | V]
    qp16 = qp.astype(_BF16)                               # cast once, sliced per head
    kvp16 = kvp.astype(_BF16)

    if has_mask:
        # additive bias, hoisted out of the head loop; large finite negative (no NaN)
        neg_bias = mask_ref[...].astype(_F32) * jnp.float32(-1e30)  # (bb, n_q, n_k)

    v_off = n_head * d_k
    fc_acc = jnp.zeros((bb * n_q, d_model), _F32)
    for h in range(n_head):        # static unroll; every dot below is batched over bb
        qh = qp16[:, h * d_k:(h + 1) * d_k].reshape(bb, n_q, d_k)
        kh = kvp16[:, h * d_k:(h + 1) * d_k].reshape(bb, n_k, d_k)
        vh = kvp16[:, v_off + h * d_v:v_off + (h + 1) * d_v].reshape(bb, n_k, d_v)

        s = jnp.einsum('bqd,bkd->bqk', qh, kh, preferred_element_type=_F32)
        if has_mask:
            s = s + neg_bias
        m = jnp.max(s, axis=-1, keepdims=True)
        e = jnp.exp(s - m)
        a = e * pl.reciprocal(jnp.sum(e, axis=-1, keepdims=True), approx=True)

        if has_attn:
            # head axis leads the output layout -> full-width lane-dense store
            attn_ref[h] = a.astype(attn_ref.dtype)

        oh = jnp.einsum('bqk,bkd->bqd', a.astype(_BF16), vh,
                        preferred_element_type=_F32)
        # concat-free output projection: accumulate this head's FC contribution
        fc_acc = fc_acc + jnp.dot(oh.reshape(bb * n_q, d_v).astype(_BF16),
                                  fc_w3_ref[h], preferred_element_type=_F32)

    # ---- output projection bias + residual + LayerNorm 1 -------------------------
    x = _layer_norm(fc_acc + fc_b_ref[...] + x_q, ln1_g_ref[...], ln1_b_ref[...], eps)

    # ---- padding mask, position-wise FFN (1x1 conv == linear), LN2, mask ---------
    pad = pad_ref[...].reshape(bb * n_q, 1)
    x = x * pad
    h1 = jnp.maximum(jnp.dot(x.astype(_BF16), w1_t_ref[...],
                             preferred_element_type=_F32) + b1_ref[...], 0.0)
    y = jnp.dot(h1.astype(_BF16), w2_t_ref[...],
                preferred_element_type=_F32) + b2_ref[...]
    z = _layer_norm(y + x, ln2_g_ref[...], ln2_b_ref[...], eps)
    out_ref[...] = (z * pad).reshape(bb, n_q, d_model).astype(out_ref.dtype)


# -----------------------------------------------------------------------------
# One-time parameter preprocessing (hoisted out of the forward pass)
# -----------------------------------------------------------------------------
def prepare_params(params, *, n_head, d_k, d_v):
    temperature = jnp.float32(np.power(d_k, 0.5))
    row = lambda v: jnp.asarray(v, _F32).reshape(1, -1)
    tbf = lambda w: jnp.asarray(w, _F32).T.astype(_BF16)
    d_model = np.asarray(params["fc_w"]).shape[0]
    # fc weight split head-major: (n_head, d_v, d_model), so the kernel never needs a
    # lane-offset concat of per-head outputs.
    fc_w_t3 = (jnp.asarray(params["fc_w"], _F32).T
               .reshape(n_head, d_v, d_model).astype(_BF16))
    return {
        "wq_t": (jnp.asarray(params["wq"], _F32).T / temperature).astype(_BF16),
        "bq": row(params["bq"]) / temperature,
        "wkv_t": jnp.concatenate([jnp.asarray(params["wk"], _F32).T,
                                  jnp.asarray(params["wv"], _F32).T],
                                 axis=1).astype(_BF16),
        "bkv": jnp.concatenate([row(params["bk"]), row(params["bv"])], axis=1),
        "fc_w_t3": fc_w_t3, "fc_b": row(params["fc_b"]),
        "ln1_g": row(params["ln1_g"]), "ln1_b": row(params["ln1_b"]),
        "w1_t": tbf(params["w1"]), "b1": row(params["b1"]),
        "w2_t": tbf(params["w2"]), "b2": row(params["b2"]),
        "ln2_g": row(params["ln2_g"]), "ln2_b": row(params["ln2_b"]),
    }


def _vmem_limit_bytes(bb, n_q, n_k, d_model, n_head, d_k, d_v, has_mask, attn_bytes):
    """Rough per-step VMEM estimate -> explicit scoped-VMEM limit (v7x-safe)."""
    f = 4
    wqk = n_head * (d_k + d_v)
    io = 2 * (bb * n_q * d_model * f + bb * n_k * d_model * f + bb * n_q * f
              + (bb * n_q * n_k if has_mask else 0)
              + bb * n_q * d_model * f
              + n_head * bb * n_q * n_k * attn_bytes)               # 2x: double-buffered
    wts = 2 * 2 * (d_model * n_head * d_k + d_model * wqk
                   + n_head * d_v * d_model + 2 * d_model * d_model)  # bf16, 2 buffers
    live = f * (bb * n_q * n_head * d_k + bb * n_k * wqk
                + 4 * bb * n_q * n_k + 3 * bb * n_q * d_model)
    est = int(1.5 * (io + wts + live))
    return int(min(max(est, 32 * 1024 * 1024), 64 * 1024 * 1024))


def cross_decoder_layer(prep, dec_in, k_in, time_mask, pad_mask, *, n_head, d_k, d_v,
                        batch_block=None, eps=1e-5, return_attn=True,
                        attn_dtype=jnp.bfloat16):
    bs, n_q, d_model = dec_in.shape
    n_k = k_in.shape[1]

    # Pick a batch chunk so the grid has several steps: BlockSpec double-buffering then
    # overlaps HBM in/out DMA with compute, and v7x can shard the "parallel" axis
    # across its two TensorCores.
    if batch_block is None:
        bb = bs
        for cand in range(max(1, bs // 4), 0, -1):
            if bs % cand == 0:
                bb = cand
                break
    else:
        bb = batch_block
    assert bs % bb == 0, "batch_block must divide batch size"

    has_mask = time_mask is not None
    pad3 = pad_mask.astype(_F32)[..., None]                 # (bs, n_q, 1)

    def batched(shape):
        nd = len(shape)
        return pl.BlockSpec((bb,) + tuple(shape[1:]),
                            lambda b, _nd=nd: (b,) + (0,) * (_nd - 1))

    def full(arr):
        nd = arr.ndim
        return pl.BlockSpec(tuple(arr.shape), lambda b, _nd=nd: (0,) * _nd)

    weights = (prep["wq_t"], prep["bq"], prep["wkv_t"], prep["bkv"],
               prep["fc_w_t3"], prep["fc_b"], prep["ln1_g"], prep["ln1_b"],
               prep["w1_t"], prep["b1"], prep["w2_t"], prep["b2"],
               prep["ln2_g"], prep["ln2_b"])

    inputs = [dec_in.astype(_F32), k_in.astype(_F32)]
    in_specs = [batched((bs, n_q, d_model)), batched((bs, n_k, d_model))]
    if has_mask:
        inputs.append(time_mask.astype(jnp.int8))           # 1 == masked, 4x less HBM
        in_specs.append(batched((bs, n_q, n_k)))
    inputs.append(pad3)
    in_specs.append(batched((bs, n_q, 1)))
    inputs.extend(weights)
    # NOTE(perf): weight index_maps are grid-invariant, so Pallas only DMAs them once;
    # the idle second buffer of the default double-buffering is accepted here.
    in_specs.extend(full(wt) for wt in weights)

    out_shape = [jax.ShapeDtypeStruct((bs, n_q, d_model), _F32)]
    out_specs = [batched((bs, n_q, d_model))]
    if return_attn:
        # Head-major attention layout written directly by the kernel; reshaping to the
        # torch (n_head*bs, n_q, n_k) layout afterwards is pure metadata (no transpose).
        out_shape.append(jax.ShapeDtypeStruct((n_head, bs, n_q, n_k), attn_dtype))
        out_specs.append(pl.BlockSpec((n_head, bb, n_q, n_k),
                                      lambda b: (0, b, 0, 0)))

    kernel = functools.partial(fused_decoder_kernel, n_head=n_head, d_k=d_k, d_v=d_v,
                               eps=eps, has_mask=has_mask, has_attn=return_attn)

    attn_bytes = jnp.dtype(attn_dtype).itemsize if return_attn else 0
    vmem_limit = _vmem_limit_bytes(bb, n_q, n_k, d_model, n_head, d_k, d_v,
                                   has_mask, attn_bytes)

    call = pl.pallas_call(
        kernel,
        grid=(bs // bb,),
        in_specs=in_specs,
        out_specs=tuple(out_specs) if return_attn else out_specs[0],
        out_shape=tuple(out_shape) if return_attn else out_shape[0],
        compiler_params=pltpu.CompilerParams(
            dimension_semantics=("parallel",),
            vmem_limit_bytes=vmem_limit),
    )
    res = call(*inputs)
    if return_attn:
        decoder_out, attn4 = res
        dec_self_attn = attn4.reshape(n_head * bs, n_q, n_k)   # metadata-only reshape
        return decoder_out, dec_self_attn
    return res, None


# -----------------------------------------------------------------------------
# Pure-JAX reference (mirrors the PyTorch forward, dropout == identity)
# -----------------------------------------------------------------------------
def ref_forward(params, dec_in, k_in, time_mask, pad_mask, *, n_head, d_k, d_v):
    bs, n_q, d_model = dec_in.shape
    n_k = k_in.shape[1]

    def ln(x, g, b):
        m = x.mean(-1, keepdims=True)
        var = ((x - m) ** 2).mean(-1, keepdims=True)
        return (x - m) / jnp.sqrt(var + 1e-5) * g + b

    qp = dec_in @ params["wq"].T + params["bq"]
    kp = k_in @ params["wk"].T + params["bk"]
    vp = k_in @ params["wv"].T + params["bv"]
    q = qp.reshape(bs, n_q, n_head, d_k).transpose(2, 0, 1, 3).reshape(-1, n_q, d_k)
    k = kp.reshape(bs, n_k, n_head, d_k).transpose(2, 0, 1, 3).reshape(-1, n_k, d_k)
    v = vp.reshape(bs, n_k, n_head, d_v).transpose(2, 0, 1, 3).reshape(-1, n_k, d_v)
    attn = jnp.einsum("bqd,bkd->bqk", q, k) / np.power(d_k, 0.5)
    if time_mask is not None:
        maskr = jnp.tile(time_mask.astype(bool), (n_head, 1, 1))
        attn = jnp.where(maskr, -jnp.inf, attn)
    attn = jax.nn.softmax(attn, axis=2)
    out = jnp.einsum("bqk,bkd->bqd", attn, v)
    out = out.reshape(n_head, bs, n_q, d_v).transpose(1, 2, 0, 3).reshape(bs, n_q, -1)
    out = out @ params["fc_w"].T + params["fc_b"]
    out = ln(out + dec_in, params["ln1_g"], params["ln1_b"])

    out = out * pad_mask[..., None]
    res = out
    h = jax.nn.relu(out @ params["w1"].T + params["b1"])
    y = h @ params["w2"].T + params["b2"]
    y = ln(y + res, params["ln2_g"], params["ln2_b"])
    y = y * pad_mask[..., None]
    return y, attn


if __name__ == "__main__":
    d_model, n_head, d_k, d_v = 32, 4, 8, 8
    bs, n_q, n_k = 2, 8, 8
    f32 = jnp.float32

    key = jax.random.PRNGKey(0)
    ks = jax.random.split(key, 20)
    nrm = lambda k, shape, std: (std * jax.random.normal(k, shape)).astype(f32)

    params = {
        "wq": nrm(ks[0], (n_head * d_k, d_model), np.sqrt(2.0 / (d_model + d_k))),
        "bq": nrm(ks[1], (n_head * d_k,), 0.05),
        "wk": nrm(ks[2], (n_head * d_k, d_model), np.sqrt(2.0 / (d_model + d_k))),
        "bk": nrm(ks[3], (n_head * d_k,), 0.05),
        "wv": nrm(ks[4], (n_head * d_v, d_model), np.sqrt(2.0 / (d_model + d_v))),
        "bv": nrm(ks[5], (n_head * d_v,), 0.05),
        "fc_w": nrm(ks[6], (d_model, n_head * d_v), np.sqrt(2.0 / (d_model + n_head * d_v))),
        "fc_b": nrm(ks[7], (d_model,), 0.05),
        "ln1_g": (1.0 + 0.1 * jax.random.normal(ks[8], (d_model,))).astype(f32),
        "ln1_b": nrm(ks[9], (d_model,), 0.05),
        # Conv1d(d_model, d_model, 1) weights, squeezed to (out, in)
        "w1": nrm(ks[10], (d_model, d_model), np.sqrt(1.0 / d_model)),
        "b1": nrm(ks[11], (d_model,), 0.05),
        "w2": nrm(ks[12], (d_model, d_model), np.sqrt(1.0 / d_model)),
        "b2": nrm(ks[13], (d_model,), 0.05),
        "ln2_g": (1.0 + 0.1 * jax.random.normal(ks[14], (d_model,))).astype(f32),
        "ln2_b": nrm(ks[15], (d_model,), 0.05),
    }

    decoder_input = jax.random.normal(ks[16], (bs, n_q, d_model), dtype=f32)
    k_input = jax.random.normal(ks[17], (bs, n_k, d_model), dtype=f32)
    # padding mask: 1.0 valid, 0.0 padded (batch 1 has 3 padded query positions)
    pad_np = np.ones((bs, n_q), dtype=np.float32)
    pad_np[1, -3:] = 0.0
    padding_mask = jnp.asarray(pad_np)
    # optional causal time mask (coverage of the masked code path; the HOI layer
    # itself always passes mask=None)
    time_mask = jnp.broadcast_to(
        jnp.triu(jnp.ones((n_q, n_k), dtype=bool), k=1), (bs, n_q, n_k))

    prep = prepare_params(params, n_head=n_head, d_k=d_k, d_v=d_v)   # one-time prep
    layer = jax.jit(functools.partial(cross_decoder_layer,
                                      n_head=n_head, d_k=d_k, d_v=d_v))

    # --- path 1: exact CrossHOIDecoderLayer semantics (mask=None) --------------------
    out, attn = layer(prep, decoder_input, k_input, None, padding_mask)
    out = jax.block_until_ready(out)
    attn = jax.block_until_ready(attn)
    out_exp, attn_exp = ref_forward(params, decoder_input, k_input, None,
                                    padding_mask, n_head=n_head, d_k=d_k, d_v=d_v)
    np.testing.assert_allclose(np.asarray(out), np.asarray(out_exp),
                               rtol=5e-2, atol=5e-2)
    np.testing.assert_allclose(np.asarray(attn.astype(f32)), np.asarray(attn_exp),
                               rtol=5e-2, atol=5e-2)
    assert out.shape == (bs, n_q, d_model) and attn.shape == (n_head * bs, n_q, n_k)

    # --- path 2: masked-attention specialization --------------------------------------
    out2, attn2 = layer(prep, decoder_input, k_input, time_mask, padding_mask)
    out2 = jax.block_until_ready(out2)
    attn2 = jax.block_until_ready(attn2)
    out_exp2, attn_exp2 = ref_forward(params, decoder_input, k_input, time_mask,
                                      padding_mask, n_head=n_head, d_k=d_k, d_v=d_v)
    np.testing.assert_allclose(np.asarray(out2), np.asarray(out_exp2),
                               rtol=5e-2, atol=5e-2)
    np.testing.assert_allclose(np.asarray(attn2.astype(f32)), np.asarray(attn_exp2),
                               rtol=5e-2, atol=5e-2)

    print("KERNEL_OK")
</pallas_src>

<mosaic_0001>
module attributes {stable_mosaic.version = 11 : i64} {
  func.func @fused_decoder_kernel(%arg0: i32, %arg1: memref<1x8x32xf32, #tpu.memory_space<vmem>>, %arg2: memref<1x8x32xf32, #tpu.memory_space<vmem>>, %arg3: memref<1x8x1xf32, #tpu.memory_space<vmem>>, %arg4: memref<32x32xbf16, #tpu.memory_space<vmem>>, %arg5: memref<1x32xf32, #tpu.memory_space<vmem>>, %arg6: memref<32x64xbf16, #tpu.memory_space<vmem>>, %arg7: memref<1x64xf32, #tpu.memory_space<vmem>>, %arg8: memref<4x8x32xbf16, #tpu.memory_space<vmem>>, %arg9: memref<1x32xf32, #tpu.memory_space<vmem>>, %arg10: memref<1x32xf32, #tpu.memory_space<vmem>>, %arg11: memref<1x32xf32, #tpu.memory_space<vmem>>, %arg12: memref<32x32xbf16, #tpu.memory_space<vmem>>, %arg13: memref<1x32xf32, #tpu.memory_space<vmem>>, %arg14: memref<32x32xbf16, #tpu.memory_space<vmem>>, %arg15: memref<1x32xf32, #tpu.memory_space<vmem>>, %arg16: memref<1x32xf32, #tpu.memory_space<vmem>>, %arg17: memref<1x32xf32, #tpu.memory_space<vmem>>, %arg18: memref<1x8x32xf32, #tpu.memory_space<vmem>>, %arg19: memref<4x1x8x8xbf16, #tpu.memory_space<vmem>>) attributes {dimension_semantics = [#tpu.dimension_semantics<parallel>], iteration_bounds = array<i64: 2>, scalar_prefetch = 0 : i64, scratch_operands = 0 : i64, tpu.core_type = #tpu.core_type<tc>, window_params = [{transform_indices = @transform_0, window_bounds = array<i64: 1, 8, 32>}, {transform_indices = @transform_1, window_bounds = array<i64: 1, 8, 32>}, {transform_indices = @transform_2, window_bounds = array<i64: 1, 8, 1>}, {pipeline_mode = #tpu.pipeline_mode<synchronous>, transform_indices = @transform_3, window_bounds = array<i64: 32, 32>}, {pipeline_mode = #tpu.pipeline_mode<synchronous>, transform_indices = @transform_4, window_bounds = array<i64: 1, 32>}, {pipeline_mode = #tpu.pipeline_mode<synchronous>, transform_indices = @transform_5, window_bounds = array<i64: 32, 64>}, {pipeline_mode = #tpu.pipeline_mode<synchronous>, transform_indices = @transform_6, window_bounds = array<i64: 1, 64>}, {pipeline_mode = #tpu.pipeline_mode<synchronous>, transform_indices = @transform_7, window_bounds = array<i64: 4, 8, 32>}, {pipeline_mode = #tpu.pipeline_mode<synchronous>, transform_indices = @transform_8, window_bounds = array<i64: 1, 32>}, {pipeline_mode = #tpu.pipeline_mode<synchronous>, transform_indices = @transform_9, window_bounds = array<i64: 1, 32>}, {pipeline_mode = #tpu.pipeline_mode<synchronous>, transform_indices = @transform_10, window_bounds = array<i64: 1, 32>}, {pipeline_mode = #tpu.pipeline_mode<synchronous>, transform_indices = @transform_11, window_bounds = array<i64: 32, 32>}, {pipeline_mode = #tpu.pipeline_mode<synchronous>, transform_indices = @transform_12, window_bounds = array<i64: 1, 32>}, {pipeline_mode = #tpu.pipeline_mode<synchronous>, transform_indices = @transform_13, window_bounds = array<i64: 32, 32>}, {pipeline_mode = #tpu.pipeline_mode<synchronous>, transform_indices = @transform_14, window_bounds = array<i64: 1, 32>}, {pipeline_mode = #tpu.pipeline_mode<synchronous>, transform_indices = @transform_15, window_bounds = array<i64: 1, 32>}, {pipeline_mode = #tpu.pipeline_mode<synchronous>, transform_indices = @transform_16, window_bounds = array<i64: 1, 32>}, {transform_indices = @transform_17, window_bounds = array<i64: 1, 8, 32>}, {transform_indices = @transform_18, window_bounds = array<i64: 4, 1, 8, 8>}]} {
    %c0 = arith.constant 0 : index
    %c0_0 = arith.constant 0 : index
    %c0_1 = arith.constant 0 : index
    %0 = vector.load %arg1[%c0, %c0_0, %c0_1] : memref<1x8x32xf32, #tpu.memory_space<vmem>>, vector<1x8x32xf32>
    %1 = vector.shape_cast %0 : vector<1x8x32xf32> to vector<8x32xf32>
    %c0_2 = arith.constant 0 : index
    %c0_3 = arith.constant 0 : index
    %c0_4 = arith.constant 0 : index
    %2 = vector.load %arg2[%c0_2, %c0_3, %c0_4] : memref<1x8x32xf32, #tpu.memory_space<vmem>>, vector<1x8x32xf32>
    %3 = vector.shape_cast %2 : vector<1x8x32xf32> to vector<8x32xf32>
    %4 = arith.truncf %1 : vector<8x32xf32> to vector<8x32xbf16>
    %c0_5 = arith.constant 0 : index
    %c0_6 = arith.constant 0 : index
    %5 = vector.load %arg4[%c0_5, %c0_6] : memref<32x32xbf16, #tpu.memory_space<vmem>>, vector<32x32xbf16>
    %cst = arith.constant dense<0.000000e+00> : vector<8x32xf32>
    %6 = tpu.matmul %4, %5, %cst {dimension_numbers = #tpu.dot_dimension_numbers<[1], [0], [0], [1], [0, 0, 1, 1], [], []>} : vector<8x32xbf16>, vector<32x32xbf16>, vector<8x32xf32> -> vector<8x32xf32>
    %c0_7 = arith.constant 0 : index
    %c0_8 = arith.constant 0 : index
    %7 = vector.load %arg5[%c0_7, %c0_8] : memref<1x32xf32, #tpu.memory_space<vmem>>, vector<1x32xf32>
    %8 = vector.broadcast %7 : vector<1x32xf32> to vector<8x32xf32>
    %9 = arith.addf %6, %8 : vector<8x32xf32>
    %10 = arith.truncf %3 : vector<8x32xf32> to vector<8x32xbf16>
    %c0_9 = arith.constant 0 : index
    %c0_10 = arith.constant 0 : index
    %11 = vector.load %arg6[%c0_9, %c0_10] : memref<32x64xbf16, #tpu.memory_space<vmem>>, vector<32x64xbf16>
    %cst_11 = arith.constant dense<0.000000e+00> : vector<8x64xf32>
    %12 = tpu.matmul %10, %11, %cst_11 {dimension_numbers = #tpu.dot_dimension_numbers<[1], [0], [0], [1], [0, 0, 1, 1], [], []>} : vector<8x32xbf16>, vector<32x64xbf16>, vector<8x64xf32> -> vector<8x64xf32>
    %c0_12 = arith.constant 0 : index
    %c0_13 = arith.constant 0 : index
    %13 = vector.load %arg7[%c0_12, %c0_13] : memref<1x64xf32, #tpu.memory_space<vmem>>, vector<1x64xf32>
    %14 = vector.broadcast %13 : vector<1x64xf32> to vector<8x64xf32>
    %15 = arith.addf %12, %14 : vector<8x64xf32>
    %16 = arith.truncf %9 : vector<8x32xf32> to vector<8x32xbf16>
    %17 = arith.truncf %15 : vector<8x64xf32> to vector<8x64xbf16>
    %cst_14 = arith.constant 0.000000e+00 : f32
    %18 = vector.broadcast %cst_14 : f32 to vector<8x32xf32>
    %19 = vector.extract_strided_slice %16 {offsets = [0, 0], sizes = [8, 8], strides = [1, 1]} : vector<8x32xbf16> to vector<8x8xbf16>
    %20 = vector.shape_cast %19 : vector<8x8xbf16> to vector<1x8x8xbf16>
    %21 = vector.extract_strided_slice %17 {offsets = [0, 0], sizes = [8, 8], strides = [1, 1]} : vector<8x64xbf16> to vector<8x8xbf16>
    %22 = vector.shape_cast %21 : vector<8x8xbf16> to vector<1x8x8xbf16>
    %23 = vector.extract_strided_slice %17 {offsets = [0, 32], sizes = [8, 8], strides = [1, 1]} : vector<8x64xbf16> to vector<8x8xbf16>
    %24 = vector.shape_cast %23 : vector<8x8xbf16> to vector<1x8x8xbf16>
    "tpu.trace_start"() <{level = 10 : i32, message = "bqd,bkd->bqk"}> : () -> ()
    %cst_15 = arith.constant dense<0.000000e+00> : vector<1x8x8xf32>
    %25 = tpu.matmul %20, %22, %cst_15 {dimension_numbers = #tpu.dot_dimension_numbers<[2], [2], [1], [1], [0, 0, 0, 1, 1, 1], [0], [0]>} : vector<1x8x8xbf16>, vector<1x8x8xbf16>, vector<1x8x8xf32> -> vector<1x8x8xf32>
    "tpu.trace_stop"() : () -> ()
    %cst_16 = arith.constant dense<0xFF800000> : vector<1x8xf32>
    %26 = vector.multi_reduction <maximumf>, %25, %cst_16 [2] : vector<1x8x8xf32> to vector<1x8xf32>
    %27 = vector.shape_cast %26 : vector<1x8xf32> to vector<1x8x1xf32>
    %28 = vector.broadcast %27 : vector<1x8x1xf32> to vector<1x8x8xf32>
    %29 = arith.subf %25, %28 : vector<1x8x8xf32>
    %30 = math.exp %29 : vector<1x8x8xf32>
    %cst_17 = arith.constant dense<0.000000e+00> : vector<1x8xf32>
    %31 = vector.multi_reduction <add>, %30, %cst_17 [2] : vector<1x8x8xf32> to vector<1x8xf32>
    %32 = vector.shape_cast %31 : vector<1x8xf32> to vector<1x8x1xf32>
    %33 = tpu.reciprocal %32 {approx = true} : vector<1x8x1xf32> -> vector<1x8x1xf32>
    %34 = vector.broadcast %33 : vector<1x8x1xf32> to vector<1x8x8xf32>
    %35 = arith.mulf %30, %34 : vector<1x8x8xf32>
    %36 = arith.truncf %35 : vector<1x8x8xf32> to vector<1x8x8xbf16>
    %c0_18 = arith.constant 0 : index
    %c0_19 = arith.constant 0 : index
    %c0_20 = arith.constant 0 : index
    %c0_21 = arith.constant 0 : index
    %37 = vector.load %arg19[%c0_18, %c0_19, %c0_20, %c0_21] : memref<4x1x8x8xbf16, #tpu.memory_space<vmem>>, vector<1x1x8x8xbf16>
    %38 = vector.shape_cast %37 : vector<1x1x8x8xbf16> to vector<1x8x8xbf16>
    %39 = vector.shape_cast %36 : vector<1x8x8xbf16> to vector<1x1x8x8xbf16>
    tpu.vector_store %arg19[%c0_18, %c0_19, %c0_20, %c0_21], %39 {strides = array<i32>} : memref<4x1x8x8xbf16, #tpu.memory_space<vmem>>, vector<1x1x8x8xbf16>,
    %40 = arith.truncf %35 : vector<1x8x8xf32> to vector<1x8x8xbf16>
    "tpu.trace_start"() <{level = 10 : i32, message = "bqk,bkd->bqd"}> : () -> ()
    %cst_22 = arith.constant dense<0.000000e+00> : vector<1x8x8xf32>
    %41 = tpu.matmul %40, %24, %cst_22 {dimension_numbers = #tpu.dot_dimension_numbers<[2], [1], [1], [2], [0, 0, 0, 1, 1, 2], [0], [0]>} : vector<1x8x8xbf16>, vector<1x8x8xbf16>, vector<1x8x8xf32> -> vector<1x8x8xf32>
    "tpu.trace_stop"() : () -> ()
    %42 = vector.shape_cast %41 : vector<1x8x8xf32> to vector<8x8xf32>
    %43 = arith.truncf %42 : vector<8x8xf32> to vector<8x8xbf16>
    %c0_23 = arith.constant 0 : index
    %c0_24 = arith.constant 0 : index
    %c0_25 = arith.constant 0 : index
    %44 = vector.load %arg8[%c0_23, %c0_24, %c0_25] : memref<4x8x32xbf16, #tpu.memory_space<vmem>>, vector<1x8x32xbf16>
    %45 = vector.shape_cast %44 : vector<1x8x32xbf16> to vector<8x32xbf16>
    %cst_26 = arith.constant dense<0.000000e+00> : vector<8x32xf32>
    %46 = tpu.matmul %43, %45, %cst_26 {dimension_numbers = #tpu.dot_dimension_numbers<[1], [0], [0], [1], [0, 0, 1, 1], [], []>} : vector<8x8xbf16>, vector<8x32xbf16>, vector<8x32xf32> -> vector<8x32xf32>
    %47 = arith.addf %18, %46 : vector<8x32xf32>
    %48 = vector.extract_strided_slice %16 {offsets = [0, 8], sizes = [8, 8], strides = [1, 1]} : vector<8x32xbf16> to vector<8x8xbf16>
    %49 = vector.shape_cast %48 : vector<8x8xbf16> to vector<1x8x8xbf16>
    %50 = vector.extract_strided_slice %17 {offsets = [0, 8], sizes = [8, 8], strides = [1, 1]} : vector<8x64xbf16> to vector<8x8xbf16>
    %51 = vector.shape_cast %50 : vector<8x8xbf16> to vector<1x8x8xbf16>
    %52 = vector.extract_strided_slice %17 {offsets = [0, 40], sizes = [8, 8], strides = [1, 1]} : vector<8x64xbf16> to vector<8x8xbf16>
    %53 = vector.shape_cast %52 : vector<8x8xbf16> to vector<1x8x8xbf16>
    "tpu.trace_start"() <{level = 10 : i32, message = "bqd,bkd->bqk"}> : () -> ()
    %cst_27 = arith.constant dense<0.000000e+00> : vector<1x8x8xf32>
    %54 = tpu.matmul %49, %51, %cst_27 {dimension_numbers = #tpu.dot_dimension_numbers<[2], [2], [1], [1], [0, 0, 0, 1, 1, 1], [0], [0]>} : vector<1x8x8xbf16>, vector<1x8x8xbf16>, vector<1x8x8xf32> -> vector<1x8x8xf32>
    "tpu.trace_stop"() : () -> ()
    %cst_28 = arith.constant dense<0xFF800000> : vector<1x8xf32>
    %55 = vector.multi_reduction <maximumf>, %54, %cst_28 [2] : vector<1x8x8xf32> to vector<1x8xf32>
    %56 = vector.shape_cast %55 : vector<1x8xf32> to vector<1x8x1xf32>
    %57 = vector.broadcast %56 : vector<1x8x1xf32> to vector<1x8x8xf32>
    %58 = arith.subf %54, %57 : vector<1x8x8xf32>
    %59 = math.exp %58 : vector<1x8x8xf32>
    %cst_29 = arith.constant dense<0.000000e+00> : vector<1x8xf32>
    %60 = vector.multi_reduction <add>, %59, %cst_29 [2] : vector<1x8x8xf32> to vector<1x8xf32>
    %61 = vector.shape_cast %60 : vector<1x8xf32> to vector<1x8x1xf32>
    %62 = tpu.reciprocal %61 {approx = true} : vector<1x8x1xf32> -> vector<1x8x1xf32>
    %63 = vector.broadcast %62 : vector<1x8x1xf32> to vector<1x8x8xf32>
    %64 = arith.mulf %59, %63 : vector<1x8x8xf32>
    %65 = arith.truncf %64 : vector<1x8x8xf32> to vector<1x8x8xbf16>
    %c1 = arith.constant 1 : index
    %c0_30 = arith.constant 0 : index
    %c0_31 = arith.constant 0 : index
    %c0_32 = arith.constant 0 : index
    %66 = vector.load %arg19[%c1, %c0_30, %c0_31, %c0_32] : memref<4x1x8x8xbf16, #tpu.memory_space<vmem>>, vector<1x1x8x8xbf16>
    %67 = vector.shape_cast %66 : vector<1x1x8x8xbf16> to vector<1x8x8xbf16>
    %68 = vector.shape_cast %65 : vector<1x8x8xbf16> to vector<1x1x8x8xbf16>
    tpu.vector_store %arg19[%c1, %c0_30, %c0_31, %c0_32], %68 {strides = array<i32>} : memref<4x1x8x8xbf16, #tpu.memory_space<vmem>>, vector<1x1x8x8xbf16>,
    %69 = arith.truncf %64 : vector<1x8x8xf32> to vector<1x8x8xbf16>
    "tpu.trace_start"() <{level = 10 : i32, message = "bqk,bkd->bqd"}> : () -> ()
    %cst_33 = arith.constant dense<0.000000e+00> : vector<1x8x8xf32>
    %70 = tpu.matmul %69, %53, %cst_33 {dimension_numbers = #tpu.dot_dimension_numbers<[2], [1], [1], [2], [0, 0, 0, 1, 1, 2], [0], [0]>} : vector<1x8x8xbf16>, vector<1x8x8xbf16>, vector<1x8x8xf32> -> vector<1x8x8xf32>
    "tpu.trace_stop"() : () -> ()
    %71 = vector.shape_cast %70 : vector<1x8x8xf32> to vector<8x8xf32>
    %72 = arith.truncf %71 : vector<8x8xf32> to vector<8x8xbf16>
    %c1_34 = arith.constant 1 : index
    %c0_35 = arith.constant 0 : index
    %c0_36 = arith.constant 0 : index
    %73 = vector.load %arg8[%c1_34, %c0_35, %c0_36] : memref<4x8x32xbf16, #tpu.memory_space<vmem>>, vector<1x8x32xbf16>
    %74 = vector.shape_cast %73 : vector<1x8x32xbf16> to vector<8x32xbf16>
    %cst_37 = arith.constant dense<0.000000e+00> : vector<8x32xf32>
    %75 = tpu.matmul %72, %74, %cst_37 {dimension_numbers = #tpu.dot_dimension_numbers<[1], [0], [0], [1], [0, 0, 1, 1], [], []>} : vector<8x8xbf16>, vector<8x32xbf16>, vector<8x32xf32> -> vector<8x32xf32>
    %76 = arith.addf %47, %75 : vector<8x32xf32>
    %77 = vector.extract_strided_slice %16 {offsets = [0, 16], sizes = [8, 8], strides = [1, 1]} : vector<8x32xbf16> to vector<8x8xbf16>
    %78 = vector.shape_cast %77 : vector<8x8xbf16> to vector<1x8x8xbf16>
    %79 = vector.extract_strided_slice %17 {offsets = [0, 16], sizes = [8, 8], strides = [1, 1]} : vector<8x64xbf16> to vector<8x8xbf16>
    %80 = vector.shape_cast %79 : vector<8x8xbf16> to vector<1x8x8xbf16>
    %81 = vector.extract_strided_slice %17 {offsets = [0, 48], sizes = [8, 8], strides = [1, 1]} : vector<8x64xbf16> to vector<8x8xbf16>
    %82 = vector.shape_cast %81 : vector<8x8xbf16> to vector<1x8x8xbf16>
    "tpu.trace_start"() <{level = 10 : i32, message = "bqd,bkd->bqk"}> : () -> ()
    %cst_38 = arith.constant dense<0.000000e+00> : vector<1x8x8xf32>
    %83 = tpu.matmul %78, %80, %cst_38 {dimension_numbers = #tpu.dot_dimension_numbers<[2], [2], [1], [1], [0, 0, 0, 1, 1, 1], [0], [0]>} : vector<1x8x8xbf16>, vector<1x8x8xbf16>, vector<1x8x8xf32> -> vector<1x8x8xf32>
    "tpu.trace_stop"() : () -> ()
    %cst_39 = arith.constant dense<0xFF800000> : vector<1x8xf32>
    %84 = vector.multi_reduction <maximumf>, %83, %cst_39 [2] : vector<1x8x8xf32> to vector<1x8xf32>
    %85 = vector.shape_cast %84 : vector<1x8xf32> to vector<1x8x1xf32>
    %86 = vector.broadcast %85 : vector<1x8x1xf32> to vector<1x8x8xf32>
    %87 = arith.subf %83, %86 : vector<1x8x8xf32>
    %88 = math.exp %87 : vector<1x8x8xf32>
    %cst_40 = arith.constant dense<0.000000e+00> : vector<1x8xf32>
    %89 = vector.multi_reduction <add>, %88, %cst_40 [2] : vector<1x8x8xf32> to vector<1x8xf32>
    %90 = vector.shape_cast %89 : vector<1x8xf32> to vector<1x8x1xf32>
    %91 = tpu.reciprocal %90 {approx = true} : vector<1x8x1xf32> -> vector<1x8x1xf32>
    %92 = vector.broadcast %91 : vector<1x8x1xf32> to vector<1x8x8xf32>
    %93 = arith.mulf %88, %92 : vector<1x8x8xf32>
    %94 = arith.truncf %93 : vector<1x8x8xf32> to vector<1x8x8xbf16>
    %c2 = arith.constant 2 : index
    %c0_41 = arith.constant 0 : index
    %c0_42 = arith.constant 0 : index
    %c0_43 = arith.constant 0 : index
    %95 = vector.load %arg19[%c2, %c0_41, %c0_42, %c0_43] : memref<4x1x8x8xbf16, #tpu.memory_space<vmem>>, vector<1x1x8x8xbf16>
    %96 = vector.shape_cast %95 : vector<1x1x8x8xbf16> to vector<1x8x8xbf16>
    %97 = vector.shape_cast %94 : vector<1x8x8xbf16> to vector<1x1x8x8xbf16>
    tpu.vector_store %arg19[%c2, %c0_41, %c0_42, %c0_43], %97 {strides = array<i32>} : memref<4x1x8x8xbf16, #tpu.memory_space<vmem>>, vector<1x1x8x8xbf16>,
    %98 = arith.truncf %93 : vector<1x8x8xf32> to vector<1x8x8xbf16>
    "tpu.trace_start"() <{level = 10 : i32, message = "bqk,bkd->bqd"}> : () -> ()
    %cst_44 = arith.constant dense<0.000000e+00> : vector<1x8x8xf32>
    %99 = tpu.matmul %98, %82, %cst_44 {dimension_numbers = #tpu.dot_dimension_numbers<[2], [1], [1], [2], [0, 0, 0, 1, 1, 2], [0], [0]>} : vector<1x8x8xbf16>, vector<1x8x8xbf16>, vector<1x8x8xf32> -> vector<1x8x8xf32>
    "tpu.trace_stop"() : () -> ()
    %100 = vector.shape_cast %99 : vector<1x8x8xf32> to vector<8x8xf32>
    %101 = arith.truncf %100 : vector<8x8xf32> to vector<8x8xbf16>
    %c2_45 = arith.constant 2 : index
    %c0_46 = arith.constant 0 : index
    %c0_47 = arith.constant 0 : index
    %102 = vector.load %arg8[%c2_45, %c0_46, %c0_47] : memref<4x8x32xbf16, #tpu.memory_space<vmem>>, vector<1x8x32xbf16>
    %103 = vector.shape_cast %102 : vector<1x8x32xbf16> to vector<8x32xbf16>
    %cst_48 = arith.constant dense<0.000000e+00> : vector<8x32xf32>
    %104 = tpu.matmul %101, %103, %cst_48 {dimension_numbers = #tpu.dot_dimension_numbers<[1], [0], [0], [1], [0, 0, 1, 1], [], []>} : vector<8x8xbf16>, vector<8x32xbf16>, vector<8x32xf32> -> vector<8x32xf32>
    %105 = arith.addf %76, %104 : vector<8x32xf32>
    %106 = vector.extract_strided_slice %16 {offsets = [0, 24], sizes = [8, 8], strides = [1, 1]} : vector<8x32xbf16> to vector<8x8xbf16>
    %107 = vector.shape_cast %106 : vector<8x8xbf16> to vector<1x8x8xbf16>
    %108 = vector.extract_strided_slice %17 {offsets = [0, 24], sizes = [8, 8], strides = [1, 1]} : vector<8x64xbf16> to vector<8x8xbf16>
    %109 = vector.shape_cast %108 : vector<8x8xbf16> to vector<1x8x8xbf16>
    %110 = vector.extract_strided_slice %17 {offsets = [0, 56], sizes = [8, 8], strides = [1, 1]} : vector<8x64xbf16> to vector<8x8xbf16>
    %111 = vector.shape_cast %110 : vector<8x8xbf16> to vector<1x8x8xbf16>
    "tpu.trace_start"() <{level = 10 : i32, message = "bqd,bkd->bqk"}> : () -> ()
    %cst_49 = arith.constant dense<0.000000e+00> : vector<1x8x8xf32>
    %112 = tpu.matmul %107, %109, %cst_49 {dimension_numbers = #tpu.dot_dimension_numbers<[2], [2], [1], [1], [0, 0, 0, 1, 1, 1], [0], [0]>} : vector<1x8x8xbf16>, vector<1x8x8xbf16>, vector<1x8x8xf32> -> vector<1x8x8xf32>
    "tpu.trace_stop"() : () -> ()
    %cst_50 = arith.constant dense<0xFF800000> : vector<1x8xf32>
    %113 = vector.multi_reduction <maximumf>, %112, %cst_50 [2] : vector<1x8x8xf32> to vector<1x8xf32>
    %114 = vector.shape_cast %113 : vector<1x8xf32> to vector<1x8x1xf32>
    %115 = vector.broadcast %114 : vector<1x8x1xf32> to vector<1x8x8xf32>
    %116 = arith.subf %112, %115 : vector<1x8x8xf32>
    %117 = math.exp %116 : vector<1x8x8xf32>
    %cst_51 = arith.constant dense<0.000000e+00> : vector<1x8xf32>
    %118 = vector.multi_reduction <add>, %117, %cst_51 [2] : vector<1x8x8xf32> to vector<1x8xf32>
    %119 = vector.shape_cast %118 : vector<1x8xf32> to vector<1x8x1xf32>
    %120 = tpu.reciprocal %119 {approx = true} : vector<1x8x1xf32> -> vector<1x8x1xf32>
    %121 = vector.broadcast %120 : vector<1x8x1xf32> to vector<1x8x8xf32>
    %122 = arith.mulf %117, %121 : vector<1x8x8xf32>
    %123 = arith.truncf %122 : vector<1x8x8xf32> to vector<1x8x8xbf16>
    %c3 = arith.constant 3 : index
    %c0_52 = arith.constant 0 : index
    %c0_53 = arith.constant 0 : index
    %c0_54 = arith.constant 0 : index
    %124 = vector.load %arg19[%c3, %c0_52, %c0_53, %c0_54] : memref<4x1x8x8xbf16, #tpu.memory_space<vmem>>, vector<1x1x8x8xbf16>
    %125 = vector.shape_cast %124 : vector<1x1x8x8xbf16> to vector<1x8x8xbf16>
    %126 = vector.shape_cast %123 : vector<1x8x8xbf16> to vector<1x1x8x8xbf16>
    tpu.vector_store %arg19[%c3, %c0_52, %c0_53, %c0_54], %126 {strides = array<i32>} : memref<4x1x8x8xbf16, #tpu.memory_space<vmem>>, vector<1x1x8x8xbf16>,
    %127 = arith.truncf %122 : vector<1x8x8xf32> to vector<1x8x8xbf16>
    "tpu.trace_start"() <{level = 10 : i32, message = "bqk,bkd->bqd"}> : () -> ()
    %cst_55 = arith.constant dense<0.000000e+00> : vector<1x8x8xf32>
    %128 = tpu.matmul %127, %111, %cst_55 {dimension_numbers = #tpu.dot_dimension_numbers<[2], [1], [1], [2], [0, 0, 0, 1, 1, 2], [0], [0]>} : vector<1x8x8xbf16>, vector<1x8x8xbf16>, vector<1x8x8xf32> -> vector<1x8x8xf32>
    "tpu.trace_stop"() : () -> ()
    %129 = vector.shape_cast %128 : vector<1x8x8xf32> to vector<8x8xf32>
    %130 = arith.truncf %129 : vector<8x8xf32> to vector<8x8xbf16>
    %c3_56 = arith.constant 3 : index
    %c0_57 = arith.constant 0 : index
    %c0_58 = arith.constant 0 : index
    %131 = vector.load %arg8[%c3_56, %c0_57, %c0_58] : memref<4x8x32xbf16, #tpu.memory_space<vmem>>, vector<1x8x32xbf16>
    %132 = vector.shape_cast %131 : vector<1x8x32xbf16> to vector<8x32xbf16>
    %cst_59 = arith.constant dense<0.000000e+00> : vector<8x32xf32>
    %133 = tpu.matmul %130, %132, %cst_59 {dimension_numbers = #tpu.dot_dimension_numbers<[1], [0], [0], [1], [0, 0, 1, 1], [], []>} : vector<8x8xbf16>, vector<8x32xbf16>, vector<8x32xf32> -> vector<8x32xf32>
    %134 = arith.addf %105, %133 : vector<8x32xf32>
    %c0_60 = arith.constant 0 : index
    %c0_61 = arith.constant 0 : index
    %135 = vector.load %arg9[%c0_60, %c0_61] : memref<1x32xf32, #tpu.memory_space<vmem>>, vector<1x32xf32>
    %136 = vector.broadcast %135 : vector<1x32xf32> to vector<8x32xf32>
    %137 = arith.addf %134, %136 : vector<8x32xf32>
    %138 = arith.addf %137, %1 : vector<8x32xf32>
    %c0_62 = arith.constant 0 : index
    %c0_63 = arith.constant 0 : index
    %139 = vector.load %arg10[%c0_62, %c0_63] : memref<1x32xf32, #tpu.memory_space<vmem>>, vector<1x32xf32>
    %c0_64 = arith.constant 0 : index
    %c0_65 = arith.constant 0 : index
    %140 = vector.load %arg11[%c0_64, %c0_65] : memref<1x32xf32, #tpu.memory_space<vmem>>, vector<1x32xf32>
    %cst_66 = arith.constant dense<0.000000e+00> : vector<8xf32>
    %141 = vector.multi_reduction <add>, %138, %cst_66 [1] : vector<8x32xf32> to vector<8xf32>
    %142 = vector.shape_cast %141 : vector<8xf32> to vector<8x1xf32>
    %cst_67 = arith.constant 3.200000e+01 : f32
    %143 = vector.broadcast %cst_67 : f32 to vector<8x1xf32>
    %144 = arith.divf %142, %143 : vector<8x1xf32>
    %145 = vector.broadcast %144 : vector<8x1xf32> to vector<8x32xf32>
    %146 = arith.subf %138, %145 : vector<8x32xf32>
    %147 = arith.mulf %146, %146 : vector<8x32xf32>
    %cst_68 = arith.constant dense<0.000000e+00> : vector<8xf32>
    %148 = vector.multi_reduction <add>, %147, %cst_68 [1] : vector<8x32xf32> to vector<8xf32>
    %149 = vector.shape_cast %148 : vector<8xf32> to vector<8x1xf32>
    %cst_69 = arith.constant 3.200000e+01 : f32
    %150 = vector.broadcast %cst_69 : f32 to vector<8x1xf32>
    %151 = arith.divf %149, %150 : vector<8x1xf32>
    %cst_70 = arith.constant 9.99999974E-6 : f32
    %152 = vector.broadcast %cst_70 : f32 to vector<8x1xf32>
    %153 = arith.addf %151, %152 : vector<8x1xf32>
    %154 = math.rsqrt %153 : vector<8x1xf32>
    %155 = vector.broadcast %154 : vector<8x1xf32> to vector<8x32xf32>
    %156 = arith.mulf %146, %155 : vector<8x32xf32>
    %157 = vector.broadcast %139 : vector<1x32xf32> to vector<8x32xf32>
    %158 = arith.mulf %156, %157 : vector<8x32xf32>
    %159 = vector.broadcast %140 : vector<1x32xf32> to vector<8x32xf32>
    %160 = arith.addf %158, %159 : vector<8x32xf32>
    %c0_71 = arith.constant 0 : index
    %c0_72 = arith.constant 0 : index
    %c0_73 = arith.constant 0 : index
    %161 = vector.load %arg3[%c0_71, %c0_72, %c0_73] : memref<1x8x1xf32, #tpu.memory_space<vmem>>, vector<1x8x1xf32>
    %162 = vector.shape_cast %161 : vector<1x8x1xf32> to vector<8x1xf32>
    %163 = vector.broadcast %162 : vector<8x1xf32> to vector<8x32xf32>
    %164 = arith.mulf %160, %163 : vector<8x32xf32>
    %165 = arith.truncf %164 : vector<8x32xf32> to vector<8x32xbf16>
    %c0_74 = arith.constant 0 : index
    %c0_75 = arith.constant 0 : index
    %166 = vector.load %arg12[%c0_74, %c0_75] : memref<32x32xbf16, #tpu.memory_space<vmem>>, vector<32x32xbf16>
    %cst_76 = arith.constant dense<0.000000e+00> : vector<8x32xf32>
    %167 = tpu.matmul %165, %166, %cst_76 {dimension_numbers = #tpu.dot_dimension_numbers<[1], [0], [0], [1], [0, 0, 1, 1], [], []>} : vector<8x32xbf16>, vector<32x32xbf16>, vector<8x32xf32> -> vector<8x32xf32>
    %c0_77 = arith.constant 0 : index
    %c0_78 = arith.constant 0 : index
    %168 = vector.load %arg13[%c0_77, %c0_78] : memref<1x32xf32, #tpu.memory_space<vmem>>, vector<1x32xf32>
    %169 = vector.broadcast %168 : vector<1x32xf32> to vector<8x32xf32>
    %170 = arith.addf %167, %169 : vector<8x32xf32>
    %cst_79 = arith.constant 0.000000e+00 : f32
    %171 = vector.broadcast %cst_79 : f32 to vector<8x32xf32>
    %172 = arith.maximumf %170, %171 : vector<8x32xf32>
    %173 = arith.truncf %172 : vector<8x32xf32> to vector<8x32xbf16>
    %c0_80 = arith.constant 0 : index
    %c0_81 = arith.constant 0 : index
    %174 = vector.load %arg14[%c0_80, %c0_81] : memref<32x32xbf16, #tpu.memory_space<vmem>>, vector<32x32xbf16>
    %cst_82 = arith.constant dense<0.000000e+00> : vector<8x32xf32>
    %175 = tpu.matmul %173, %174, %cst_82 {dimension_numbers = #tpu.dot_dimension_numbers<[1], [0], [0], [1], [0, 0, 1, 1], [], []>} : vector<8x32xbf16>, vector<32x32xbf16>, vector<8x32xf32> -> vector<8x32xf32>
    %c0_83 = arith.constant 0 : index
    %c0_84 = arith.constant 0 : index
    %176 = vector.load %arg15[%c0_83, %c0_84] : memref<1x32xf32, #tpu.memory_space<vmem>>, vector<1x32xf32>
    %177 = vector.broadcast %176 : vector<1x32xf32> to vector<8x32xf32>
    %178 = arith.addf %175, %177 : vector<8x32xf32>
    %179 = arith.addf %178, %164 : vector<8x32xf32>
    %c0_85 = arith.constant 0 : index
    %c0_86 = arith.constant 0 : index
    %180 = vector.load %arg16[%c0_85, %c0_86] : memref<1x32xf32, #tpu.memory_space<vmem>>, vector<1x32xf32>
    %c0_87 = arith.constant 0 : index
    %c0_88 = arith.constant 0 : index
    %181 = vector.load %arg17[%c0_87, %c0_88] : memref<1x32xf32, #tpu.memory_space<vmem>>, vector<1x32xf32>
    %cst_89 = arith.constant dense<0.000000e+00> : vector<8xf32>
    %182 = vector.multi_reduction <add>, %179, %cst_89 [1] : vector<8x32xf32> to vector<8xf32>
    %183 = vector.shape_cast %182 : vector<8xf32> to vector<8x1xf32>
    %cst_90 = arith.constant 3.200000e+01 : f32
    %184 = vector.broadcast %cst_90 : f32 to vector<8x1xf32>
    %185 = arith.divf %183, %184 : vector<8x1xf32>
    %186 = vector.broadcast %185 : vector<8x1xf32> to vector<8x32xf32>
    %187 = arith.subf %179, %186 : vector<8x32xf32>
    %188 = arith.mulf %187, %187 : vector<8x32xf32>
    %cst_91 = arith.constant dense<0.000000e+00> : vector<8xf32>
    %189 = vector.multi_reduction <add>, %188, %cst_91 [1] : vector<8x32xf32> to vector<8xf32>
    %190 = vector.shape_cast %189 : vector<8xf32> to vector<8x1xf32>
    %cst_92 = arith.constant 3.200000e+01 : f32
    %191 = vector.broadcast %cst_92 : f32 to vector<8x1xf32>
    %192 = arith.divf %190, %191 : vector<8x1xf32>
    %cst_93 = arith.constant 9.99999974E-6 : f32
    %193 = vector.broadcast %cst_93 : f32 to vector<8x1xf32>
    %194 = arith.addf %192, %193 : vector<8x1xf32>
    %195 = math.rsqrt %194 : vector<8x1xf32>
    %196 = vector.broadcast %195 : vector<8x1xf32> to vector<8x32xf32>
    %197 = arith.mulf %187, %196 : vector<8x32xf32>
    %198 = vector.broadcast %180 : vector<1x32xf32> to vector<8x32xf32>
    %199 = arith.mulf %197, %198 : vector<8x32xf32>
    %200 = vector.broadcast %181 : vector<1x32xf32> to vector<8x32xf32>
    %201 = arith.addf %199, %200 : vector<8x32xf32>
    %202 = vector.broadcast %162 : vector<8x1xf32> to vector<8x32xf32>
    %203 = arith.mulf %201, %202 : vector<8x32xf32>
    %204 = vector.shape_cast %203 : vector<8x32xf32> to vector<1x8x32xf32>
    %c0_94 = arith.constant 0 : index
    %c0_95 = arith.constant 0 : index
    %c0_96 = arith.constant 0 : index
    %205 = vector.load %arg18[%c0_94, %c0_95, %c0_96] : memref<1x8x32xf32, #tpu.memory_space<vmem>>, vector<1x8x32xf32>
    tpu.vector_store %arg18[%c0_94, %c0_95, %c0_96], %204 {strides = array<i32>} : memref<1x8x32xf32, #tpu.memory_space<vmem>>, vector<1x8x32xf32>,
    return
  }
  func.func @transform_0(%arg0: i32) -> (i32, i32, i32) {
    %c0_i32 = arith.constant 0 : i32
    %c0_i32_0 = arith.constant 0 : i32
    %c0_i32_1 = arith.constant 0 : i32
    return %arg0, %c0_i32, %c0_i32_0 : i32, i32, i32
  }
  func.func @transform_1(%arg0: i32) -> (i32, i32, i32) {
    %c0_i32 = arith.constant 0 : i32
    %c0_i32_0 = arith.constant 0 : i32
    %c0_i32_1 = arith.constant 0 : i32
    return %arg0, %c0_i32, %c0_i32_0 : i32, i32, i32
  }
  func.func @transform_2(%arg0: i32) -> (i32, i32, i32) {
    %c0_i32 = arith.constant 0 : i32
    %c0_i32_0 = arith.constant 0 : i32
    %c0_i32_1 = arith.constant 0 : i32
    return %arg0, %c0_i32, %c0_i32_0 : i32, i32, i32
  }
  func.func @transform_3(%arg0: i32) -> (i32, i32) {
    %c0_i32 = arith.constant 0 : i32
    %c0_i32_0 = arith.constant 0 : i32
    %c0_i32_1 = arith.constant 0 : i32
    return %c0_i32, %c0_i32_0 : i32, i32
  }
  func.func @transform_4(%arg0: i32) -> (i32, i32) {
    %c0_i32 = arith.constant 0 : i32
    %c0_i32_0 = arith.constant 0 : i32
    %c0_i32_1 = arith.constant 0 : i32
    return %c0_i32, %c0_i32_0 : i32, i32
  }
  func.func @transform_5(%arg0: i32) -> (i32, i32) {
    %c0_i32 = arith.constant 0 : i32
    %c0_i32_0 = arith.constant 0 : i32
    %c0_i32_1 = arith.constant 0 : i32
    return %c0_i32, %c0_i32_0 : i32, i32
  }
  func.func @transform_6(%arg0: i32) -> (i32, i32) {
    %c0_i32 = arith.constant 0 : i32
    %c0_i32_0 = arith.constant 0 : i32
    %c0_i32_1 = arith.constant 0 : i32
    return %c0_i32, %c0_i32_0 : i32, i32
  }
  func.func @transform_7(%arg0: i32) -> (i32, i32, i32) {
    %c0_i32 = arith.constant 0 : i32
    %c0_i32_0 = arith.constant 0 : i32
    %c0_i32_1 = arith.constant 0 : i32
    %c0_i32_2 = arith.constant 0 : i32
    return %c0_i32, %c0_i32_0, %c0_i32_1 : i32, i32, i32
  }
  func.func @transform_8(%arg0: i32) -> (i32, i32) {
    %c0_i32 = arith.constant 0 : i32
    %c0_i32_0 = arith.constant 0 : i32
    %c0_i32_1 = arith.constant 0 : i32
    return %c0_i32, %c0_i32_0 : i32, i32
  }
  func.func @transform_9(%arg0: i32) -> (i32, i32) {
    %c0_i32 = arith.constant 0 : i32
    %c0_i32_0 = arith.constant 0 : i32
    %c0_i32_1 = arith.constant 0 : i32
    return %c0_i32, %c0_i32_0 : i32, i32
  }
  func.func @transform_10(%arg0: i32) -> (i32, i32) {
    %c0_i32 = arith.constant 0 : i32
    %c0_i32_0 = arith.constant 0 : i32
    %c0_i32_1 = arith.constant 0 : i32
    return %c0_i32, %c0_i32_0 : i32, i32
  }
  func.func @transform_11(%arg0: i32) -> (i32, i32) {
    %c0_i32 = arith.constant 0 : i32
    %c0_i32_0 = arith.constant 0 : i32
    %c0_i32_1 = arith.constant 0 : i32
    return %c0_i32, %c0_i32_0 : i32, i32
  }
  func.func @transform_12(%arg0: i32) -> (i32, i32) {
    %c0_i32 = arith.constant 0 : i32
    %c0_i32_0 = arith.constant 0 : i32
    %c0_i32_1 = arith.constant 0 : i32
    return %c0_i32, %c0_i32_0 : i32, i32
  }
  func.func @transform_13(%arg0: i32) -> (i32, i32) {
    %c0_i32 = arith.constant 0 : i32
    %c0_i32_0 = arith.constant 0 : i32
    %c0_i32_1 = arith.constant 0 : i32
    return %c0_i32, %c0_i32_0 : i32, i32
  }
  func.func @transform_14(%arg0: i32) -> (i32, i32) {
    %c0_i32 = arith.constant 0 : i32
    %c0_i32_0 = arith.constant 0 : i32
    %c0_i32_1 = arith.constant 0 : i32
    return %c0_i32, %c0_i32_0 : i32, i32
  }
  func.func @transform_15(%arg0: i32) -> (i32, i32) {
    %c0_i32 = arith.constant 0 : i32
    %c0_i32_0 = arith.constant 0 : i32
    %c0_i32_1 = arith.constant 0 : i32
    return %c0_i32, %c0_i32_0 : i32, i32
  }
  func.func @transform_16(%arg0: i32) -> (i32, i32) {
    %c0_i32 = arith.constant 0 : i32
    %c0_i32_0 = arith.constant 0 : i32
    %c0_i32_1 = arith.constant 0 : i32
    return %c0_i32, %c0_i32_0 : i32, i32
  }
  func.func @transform_17(%arg0: i32) -> (i32, i32, i32) {
    %c0_i32 = arith.constant 0 : i32
    %c0_i32_0 = arith.constant 0 : i32
    %c0_i32_1 = arith.constant 0 : i32
    return %arg0, %c0_i32, %c0_i32_0 : i32, i32, i32
  }
  func.func @transform_18(%arg0: i32) -> (i32, i32, i32, i32) {
    %c0_i32 = arith.constant 0 : i32
    %c0_i32_0 = arith.constant 0 : i32
    %c0_i32_1 = arith.constant 0 : i32
    %c0_i32_2 = arith.constant 0 : i32
    return %c0_i32, %arg0, %c0_i32_0, %c0_i32_1 : i32, i32, i32, i32
  }
}

</mosaic_0001>

<llo_original>
// kernel: cross_decoder_layer.1
$region0: #{cross_decoder_layer.1}
  #allocation0 [shape = 'u32[]', space=smem, size = 0x4, offset = 0x4, fixed_abs, tag = 'smem constant byte address 0x4 - core index']
  #allocation1 [shape = 'u32[144,128]{1,0:T(1,128)}', space=vmem, size = 0x12000, scoped, tag = 'internal scratch']
  %s0 = inlined_call_operand.vmem [shape: f32[2,8,32], index: 0, kind: input, shape index: {}]
  %s1 = inlined_call_operand.vmem [shape: f32[2,8,32], index: 1, kind: input, shape index: {}]
  %s2 = inlined_call_operand.vmem [shape: f32[2,8,1], index: 2, kind: input, shape index: {}]
  %s3 = inlined_call_operand.vmem [shape: bf16[32,32], index: 3, kind: input, shape index: {}]
  %s4 = inlined_call_operand.hbm [shape: f32[1,32], index: 4, kind: input, shape index: {}]
  %s5 = inlined_call_operand.vmem [shape: bf16[32,64], index: 5, kind: input, shape index: {}]
  %s6 = inlined_call_operand.hbm [shape: f32[1,64], index: 6, kind: input, shape index: {}]
  %s7 = inlined_call_operand.hbm [shape: bf16[4,8,32], index: 7, kind: input, shape index: {}]
  %s8 = inlined_call_operand.hbm [shape: f32[1,32], index: 8, kind: input, shape index: {}]
  %s9 = inlined_call_operand.hbm [shape: f32[1,32], index: 9, kind: input, shape index: {}]
  %s10 = inlined_call_operand.hbm [shape: f32[1,32], index: 10, kind: input, shape index: {}]
  %s11 = inlined_call_operand.hbm [shape: bf16[32,32], index: 11, kind: input, shape index: {}]
  %s12 = inlined_call_operand.hbm [shape: f32[1,32], index: 12, kind: input, shape index: {}]
  %s13 = inlined_call_operand.hbm [shape: bf16[32,32], index: 13, kind: input, shape index: {}]
  %s14 = inlined_call_operand.hbm [shape: f32[1,32], index: 14, kind: input, shape index: {}]
  %s15 = inlined_call_operand.vmem [shape: f32[1,32], index: 15, kind: input, shape index: {}]
  %s16 = inlined_call_operand.hbm [shape: f32[1,32], index: 16, kind: input, shape index: {}]
  %s17 = inlined_call_operand.hbm [shape: f32[2,8,32], index: 17, kind: output, shape index: {0}]
  %s18 = inlined_call_operand.hbm [shape: bf16[4,2,8,8], index: 18, kind: output, shape index: {1}]
  %19 = xla_tuple %s17, %s18
  %s20 = sld [smem:[#allocation0]]
  $region153: #{cross_decoder_layer.1} parent=0
    _
  %s22 = ssub.s32 1, %s20
  %s23 = scalar_select 0, %s22, %s20
  $region1: #{cross_decoder_layer.1} parent=0
    #allocation2 [shape = 'u8[512]{0}', space=vmem, size = 0x400, scoped, tag = 'input window, operand 4, single buffered']
    #allocation3 [shape = 's32[2]{0}', space=sflag, size = 0x8, scoped, tag = 'scoped memory for cross_decoder_layer.1']
    #allocation4 [shape = 's32[2]{0}', space=sflag, size = 0x8, scoped, tag = 'scoped memory for cross_decoder_layer.1']
    #allocation5 [shape = 'u8[512]{0}', space=vmem, size = 0x400, scoped, tag = 'input window, operand 6, single buffered']
    #allocation6 [shape = 's32[1]{0}', space=sflag, size = 0x4, scoped, tag = 'scoped memory for cross_decoder_layer.1']
    #allocation7 [shape = 'u8[8192]{0}', space=vmem, size = 0x2000, scoped, tag = 'input window, operand 7, single buffered']
    #allocation8 [shape = 'u8[512]{0}', space=vmem, size = 0x400, scoped, tag = 'input window, operand 8, single buffered']
    #allocation9 [shape = 's32[1]{0}', space=sflag, size = 0x4, scoped, tag = 'scoped memory for cross_decoder_layer.1']
    #allocation10 [shape = 'u8[512]{0}', space=vmem, size = 0x400, scoped, tag = 'input window, operand 9, single buffered']
    #allocation11 [shape = 'u8[512]{0}', space=vmem, size = 0x400, scoped, tag = 'input window, operand 10, single buffered']
    #allocation12 [shape = 's32[1]{0}', space=sflag, size = 0x4, scoped, tag = 'scoped memory for cross_decoder_layer.1']
    #allocation13 [shape = 'u8[8192]{0}', space=vmem, size = 0x2000, scoped, tag = 'input window, operand 11, single buffered']
    #allocation14 [shape = 'u8[512]{0}', space=vmem, size = 0x400, scoped, tag = 'input window, operand 12, single buffered']
    #allocation15 [shape = 's32[1]{0}', space=sflag, size = 0x4, scoped, tag = 'scoped memory for cross_decoder_layer.1']
    #allocation16 [shape = 'u8[8192]{0}', space=vmem, size = 0x2000, scoped, tag = 'input window, operand 13, single buffered']
    #allocation17 [shape = 'u8[512]{0}', space=vmem, size = 0x400, scoped, tag = 'input window, operand 14, single buffered']
    #allocation18 [shape = 's32[1]{0}', space=sflag, size = 0x4, scoped, tag = 'scoped memory for cross_decoder_layer.1']
    #allocation19 [shape = 'u8[512]{0}', space=vmem, size = 0x400, scoped, tag = 'input window, operand 16, single buffered']
    #allocation20 [shape = 'u8[8192]{0}', space=vmem, size = 0x2000, scoped, tag = 'output window, operand 0']
    #allocation21 [shape = 'u8[16384]{0}', space=vmem, size = 0x4000, scoped, tag = 'output window, operand 1']
    #allocation22 [shape = 's32[2]{0}', space=sflag, size = 0x8, scoped, tag = 'scoped memory for cross_decoder_layer.1']
    %24 = vsyncpa [#allocation3], 0
    %25 = vsyncpa [#allocation6], 0
    %26 = vsyncpa [#allocation9], 0
    %27 = vsyncpa [#allocation12], 0
    %28 = vsyncpa [#allocation15], 0
    %29 = vsyncpa [#allocation18], 0
    %30 = vsyncpa [#allocation4], 0
    %s31 = scalar_lea.sflag [#allocation4], 1
    %32 = vsyncpa %s31, 0
    %33 = vsyncpa [#allocation22], 0
    %s34 = scalar_lea.sflag [#allocation22], 1
    %35 = vsyncpa %s34, 0
    loop: start=0, step=1, limit=4
    $region2: #{cross_decoder_layer.1} parent=1 // loop_pre_header
      _
    $region3: #{cross_decoder_layer.1} parent=1 // loop_header
      %s37 = sphi 0, %s41
      %p38 = scmp.ge.s32.totalorder %s37, 4
      %s47 = sphi 0, %s49
      %s50 = sphi 0, %s47
      %s51 = sphi 0, %s50
      %s67 = sphi 0, %s51
      %s73 = sphi 0, %s75
      %s76 = sphi 0, %s73
      %s77 = sphi 0, %s76
      %s93 = sphi 0, %s77
      %s99 = sphi 0, %s101
      %s102 = sphi 0, %s99
      %s103 = sphi 0, %s102
      %s119 = sphi 0, %s103
      %s123 = sphi 0, %s123
      %s125 = sphi 0, %s123
      %s126 = sphi 0, %s125
      %s140 = sphi 0, %s126
      %s144 = sphi 0, %s144
      %s146 = sphi 0, %s144
      %s147 = sphi 0, %s146
      %s161 = sphi 0, %s147
      %s165 = sphi 0, %s165
      %s167 = sphi 0, %s165
      %s168 = sphi 0, %s167
      %s182 = sphi 0, %s168
      %s186 = sphi 0, %s186
      %s188 = sphi 0, %s186
      %s189 = sphi 0, %s188
      %s203 = sphi 0, %s189
      %s207 = sphi 0, %s207
      %s209 = sphi 0, %s207
      %s210 = sphi 0, %s209
      %s224 = sphi 0, %s210
      %s228 = sphi 0, %s228
      %s230 = sphi 0, %s228
      %s231 = sphi 0, %s230
      %s245 = sphi 0, %s231
      %s249 = sphi 0, %s249
      %s251 = sphi 0, %s249
      %s252 = sphi 0, %s251
      %s266 = sphi 0, %s252
      %s270 = sphi 0, %s270
      %s272 = sphi 0, %s270
      %s273 = sphi 0, %s272
      %s287 = sphi 0, %s273
      %s291 = sphi 0, %s291
      %s293 = sphi 0, %s291
      %s294 = sphi 0, %s293
      %s308 = sphi 0, %s294
      %s312 = sphi 0, %s312
      %s314 = sphi 0, %s312
      %s315 = sphi 0, %s314
      %s329 = sphi 0, %s315
      %s333 = sphi 0, %s333
      %s335 = sphi 0, %s333
      %s336 = sphi 0, %s335
      %s350 = sphi 0, %s336
      %s354 = sphi 0, %s354
      %s356 = sphi 0, %s354
      %s357 = sphi 0, %s356
      %s371 = sphi 0, %s357
      %s375 = sphi 0, %s375
      %s377 = sphi 0, %s375
      %s378 = sphi 0, %s377
      %s392 = sphi 0, %s378
      %s396 = sphi 0, %s396
      %s398 = sphi 0, %s396
      %s399 = sphi 0, %s398
      %s413 = sphi 0, %s399
      %s419 = sphi 0, %s421
      %s422 = sphi 0, %s419
      %s423 = sphi 0, %s422
      %s439 = sphi 0, %s423
      %s445 = sphi 0, %s447
      %s448 = sphi 0, %s445
      %s449 = sphi 0, %s448
      %s465 = sphi 0, %s449
    $region4: #{cross_decoder_layer.1} parent=1 // loop_header_branch
      %40 = sbr.rel (%p38) target = $region8
    $region5: #{cross_decoder_layer.1} parent=1 // loop_body
      %s42 = ssub.s32 %s37, 1
      %s43 = ssub.s32 %s37, 2
      %s44 = sadd.s32 %s37, 1
      %s45 = ssub.s32 %s37, %s44
      %p46 = scmp.eq.s32.totalorder %s45, 0
      %s48 = sadd.s32 %s47, 1
      %s49 = scalar_select %p46, %s47, %s48
      %p52 = pneg %p46
      %p53 = scmp.eq.s32.totalorder %s37, 1
      %p54 = por %p52, %p53
      %p55 = scmp.ne.s32.totalorder %s47, %s50
      %p56 = scmp.eq.s32.totalorder %s37, 0
      %p57 = por %p55, %p56
      %p58 = scmp.ne.s32.totalorder %s47, %s50
      %p59 = scmp.eq.s32.totalorder %s42, 1
      %p60 = por %p58, %p59
      %p61 = scmp.ne.s32.totalorder %s50, %s51
      %p62 = scmp.eq.s32.totalorder %s42, 0
      %p63 = por %p61, %p62
      %p64 = scmp.ne.s32.totalorder %s50, %s51
      %p65 = scmp.eq.s32.totalorder %s43, 1
      %p66 = por %p64, %p65
      %p68 = scmp.ne.s32.totalorder %s51, %s67
      %p69 = scmp.eq.s32.totalorder %s43, 0
      %p70 = por %p68, %p69
      %s71 = ssub.s32 %s37, %s44
      %p72 = scmp.eq.s32.totalorder %s71, 0
      %s74 = sadd.s32 %s73, 1
      %s75 = scalar_select %p72, %s73, %s74
      %p78 = pneg %p72
      %p79 = scmp.eq.s32.totalorder %s37, 1
      %p80 = por %p78, %p79
      %p81 = scmp.ne.s32.totalorder %s73, %s76
      %p82 = scmp.eq.s32.totalorder %s37, 0
      %p83 = por %p81, %p82
      %p84 = scmp.ne.s32.totalorder %s73, %s76
      %p85 = scmp.eq.s32.totalorder %s42, 1
      %p86 = por %p84, %p85
      %p87 = scmp.ne.s32.totalorder %s76, %s77
      %p88 = scmp.eq.s32.totalorder %s42, 0
      %p89 = por %p87, %p88
      %p90 = scmp.ne.s32.totalorder %s76, %s77
      %p91 = scmp.eq.s32.totalorder %s43, 1
      %p92 = por %p90, %p91
      %p94 = scmp.ne.s32.totalorder %s77, %s93
      %p95 = scmp.eq.s32.totalorder %s43, 0
      %p96 = por %p94, %p95
      %s97 = ssub.s32 %s37, %s44
      %p98 = scmp.eq.s32.totalorder %s97, 0
      %s100 = sadd.s32 %s99, 1
      %s101 = scalar_select %p98, %s99, %s100
      %p104 = pneg %p98
      %p105 = scmp.eq.s32.totalorder %s37, 1
      %p106 = por %p104, %p105
      %p107 = scmp.ne.s32.totalorder %s99, %s102
      %p108 = scmp.eq.s32.totalorder %s37, 0
      %p109 = por %p107, %p108
      %p110 = scmp.ne.s32.totalorder %s99, %s102
      %p111 = scmp.eq.s32.totalorder %s42, 1
      %p112 = por %p110, %p111
      %p113 = scmp.ne.s32.totalorder %s102, %s103
      %p114 = scmp.eq.s32.totalorder %s42, 0
      %p115 = por %p113, %p114
      %p116 = scmp.ne.s32.totalorder %s102, %s103
      %p117 = scmp.eq.s32.totalorder %s43, 1
      %p118 = por %p116, %p117
      %p120 = scmp.ne.s32.totalorder %s103, %s119
      %p121 = scmp.eq.s32.totalorder %s43, 0
      %p122 = por %p120, %p121
      %s124 = sadd.s32 %s123, 1
      %p127 = scmp.eq.s32.totalorder %s37, 1
      %p128 = scmp.ne.s32.totalorder %s123, %s125
      %p129 = scmp.eq.s32.totalorder %s37, 0
      %p130 = por %p128, %p129
      %p131 = scmp.ne.s32.totalorder %s123, %s125
      %p132 = scmp.eq.s32.totalorder %s42, 1
      %p133 = por %p131, %p132
      %p134 = scmp.ne.s32.totalorder %s125, %s126
      %p135 = scmp.eq.s32.totalorder %s42, 0
      %p136 = por %p134, %p135
      %p137 = scmp.ne.s32.totalorder %s125, %s126
      %p138 = scmp.eq.s32.totalorder %s43, 1
      %p139 = por %p137, %p138
      %p141 = scmp.ne.s32.totalorder %s126, %s140
      %p142 = scmp.eq.s32.totalorder %s43, 0
      %p143 = por %p141, %p142
      %s145 = sadd.s32 %s144, 1
      %p148 = scmp.eq.s32.totalorder %s37, 1
      %p149 = scmp.ne.s32.totalorder %s144, %s146
      %p150 = scmp.eq.s32.totalorder %s37, 0
      %p151 = por %p149, %p150
      %p152 = scmp.ne.s32.totalorder %s144, %s146
      %p153 = scmp.eq.s32.totalorder %s42, 1
      %p154 = por %p152, %p153
      %p155 = scmp.ne.s32.totalorder %s146, %s147
      %p156 = scmp.eq.s32.totalorder %s42, 0
      %p157 = por %p155, %p156
      %p158 = scmp.ne.s32.totalorder %s146, %s147
      %p159 = scmp.eq.s32.totalorder %s43, 1
      %p160 = por %p158, %p159
      %p162 = scmp.ne.s32.totalorder %s147, %s161
      %p163 = scmp.eq.s32.totalorder %s43, 0
      %p164 = por %p162, %p163
      %s166 = sadd.s32 %s165, 1
      %p169 = scmp.eq.s32.totalorder %s37, 1
      %p170 = scmp.ne.s32.totalorder %s165, %s167
      %p171 = scmp.eq.s32.totalorder %s37, 0
      %p172 = por %p170, %p171
      %p173 = scmp.ne.s32.totalorder %s165, %s167
      %p174 = scmp.eq.s32.totalorder %s42, 1
      %p175 = por %p173, %p174
      %p176 = scmp.ne.s32.totalorder %s167, %s168
      %p177 = scmp.eq.s32.totalorder %s42, 0
      %p178 = por %p176, %p177
      %p179 = scmp.ne.s32.totalorder %s167, %s168
      %p180 = scmp.eq.s32.totalorder %s43, 1
      %p181 = por %p179, %p180
      %p183 = scmp.ne.s32.totalorder %s168, %s182
      %p184 = scmp.eq.s32.totalorder %s43, 0
      %p185 = por %p183, %p184
      %s187 = sadd.s32 %s186, 1
      %p190 = scmp.eq.s32.totalorder %s37, 1
      %p191 = scmp.ne.s32.totalorder %s186, %s188
      %p192 = scmp.eq.s32.totalorder %s37, 0
      %p193 = por %p191, %p192
      %p194 = scmp.ne.s32.totalorder %s186, %s188
      %p195 = scmp.eq.s32.totalorder %s42, 1
      %p196 = por %p194, %p195
      %p197 = scmp.ne.s32.totalorder %s188, %s189
      %p198 = scmp.eq.s32.totalorder %s42, 0
      %p199 = por %p197, %p198
      %p200 = scmp.ne.s32.totalorder %s188, %s189
      %p201 = scmp.eq.s32.totalorder %s43, 1
      %p202 = por %p200, %p201
      %p204 = scmp.ne.s32.totalorder %s189, %s203
      %p205 = scmp.eq.s32.totalorder %s43, 0
      %p206 = por %p204, %p205
      %s208 = sadd.s32 %s207, 1
      %p211 = scmp.eq.s32.totalorder %s37, 1
      %p212 = scmp.ne.s32.totalorder %s207, %s209
      %p213 = scmp.eq.s32.totalorder %s37, 0
      %p214 = por %p212, %p213
      %p215 = scmp.ne.s32.totalorder %s207, %s209
      %p216 = scmp.eq.s32.totalorder %s42, 1
      %p217 = por %p215, %p216
      %p218 = scmp.ne.s32.totalorder %s209, %s210
      %p219 = scmp.eq.s32.totalorder %s42, 0
      %p220 = por %p218, %p219
      %p221 = scmp.ne.s32.totalorder %s209, %s210
      %p222 = scmp.eq.s32.totalorder %s43, 1
      %p223 = por %p221, %p222
      %p225 = scmp.ne.s32.totalorder %s210, %s224
      %p226 = scmp.eq.s32.totalorder %s43, 0
      %p227 = por %p225, %p226
      %s229 = sadd.s32 %s228, 1
      %p232 = scmp.eq.s32.totalorder %s37, 1
      %p233 = scmp.ne.s32.totalorder %s228, %s230
      %p234 = scmp.eq.s32.totalorder %s37, 0
      %p235 = por %p233, %p234
      %p236 = scmp.ne.s32.totalorder %s228, %s230
      %p237 = scmp.eq.s32.totalorder %s42, 1
      %p238 = por %p236, %p237
      %p239 = scmp.ne.s32.totalorder %s230, %s231
      %p240 = scmp.eq.s32.totalorder %s42, 0
      %p241 = por %p239, %p240
      %p242 = scmp.ne.s32.totalorder %s230, %s231
      %p243 = scmp.eq.s32.totalorder %s43, 1
      %p244 = por %p242, %p243
      %p246 = scmp.ne.s32.totalorder %s231, %s245
      %p247 = scmp.eq.s32.totalorder %s43, 0
      %p248 = por %p246, %p247
      %s250 = sadd.s32 %s249, 1
      %p253 = scmp.eq.s32.totalorder %s37, 1
      %p254 = scmp.ne.s32.totalorder %s249, %s251
      %p255 = scmp.eq.s32.totalorder %s37, 0
      %p256 = por %p254, %p255
      %p257 = scmp.ne.s32.totalorder %s249, %s251
      %p258 = scmp.eq.s32.totalorder %s42, 1
      %p259 = por %p257, %p258
      %p260 = scmp.ne.s32.totalorder %s251, %s252
      %p261 = scmp.eq.s32.totalorder %s42, 0
      %p262 = por %p260, %p261
      %p263 = scmp.ne.s32.totalorder %s251, %s252
      %p264 = scmp.eq.s32.totalorder %s43, 1
      %p265 = por %p263, %p264
      %p267 = scmp.ne.s32.totalorder %s252, %s266
      %p268 = scmp.eq.s32.totalorder %s43, 0
      %p269 = por %p267, %p268
      %s271 = sadd.s32 %s270, 1
      %p274 = scmp.eq.s32.totalorder %s37, 1
      %p275 = scmp.ne.s32.totalorder %s270, %s272
      %p276 = scmp.eq.s32.totalorder %s37, 0
      %p277 = por %p275, %p276
      %p278 = scmp.ne.s32.totalorder %s270, %s272
      %p279 = scmp.eq.s32.totalorder %s42, 1
      %p280 = por %p278, %p279
      %p281 = scmp.ne.s32.totalorder %s272, %s273
      %p282 = scmp.eq.s32.totalorder %s42, 0
      %p283 = por %p281, %p282
      %p284 = scmp.ne.s32.totalorder %s272, %s273
      %p285 = scmp.eq.s32.totalorder %s43, 1
      %p286 = por %p284, %p285
      %p288 = scmp.ne.s32.totalorder %s273, %s287
      %p289 = scmp.eq.s32.totalorder %s43, 0
      %p290 = por %p288, %p289
      %s292 = sadd.s32 %s291, 1
      %p295 = scmp.eq.s32.totalorder %s37, 1
      %p296 = scmp.ne.s32.totalorder %s291, %s293
      %p297 = scmp.eq.s32.totalorder %s37, 0
      %p298 = por %p296, %p297
      %p299 = scmp.ne.s32.totalorder %s291, %s293
      %p300 = scmp.eq.s32.totalorder %s42, 1
      %p301 = por %p299, %p300
      %p302 = scmp.ne.s32.totalorder %s293, %s294
      %p303 = scmp.eq.s32.totalorder %s42, 0
      %p304 = por %p302, %p303
      %p305 = scmp.ne.s32.totalorder %s293, %s294
      %p306 = scmp.eq.s32.totalorder %s43, 1
      %p307 = por %p305, %p306
      %p309 = scmp.ne.s32.totalorder %s294, %s308
      %p310 = scmp.eq.s32.totalorder %s43, 0
      %p311 = por %p309, %p310
      %s313 = sadd.s32 %s312, 1
      %p316 = scmp.eq.s32.totalorder %s37, 1
      %p317 = scmp.ne.s32.totalorder %s312, %s314
      %p318 = scmp.eq.s32.totalorder %s37, 0
      %p319 = por %p317, %p318
      %p320 = scmp.ne.s32.totalorder %s312, %s314
      %p321 = scmp.eq.s32.totalorder %s42, 1
      %p322 = por %p320, %p321
      %p323 = scmp.ne.s32.totalorder %s314, %s315
      %p324 = scmp.eq.s32.totalorder %s42, 0
      %p325 = por %p323, %p324
      %p326 = scmp.ne.s32.totalorder %s314, %s315
      %p327 = scmp.eq.s32.totalorder %s43, 1
      %p328 = por %p326, %p327
      %p330 = scmp.ne.s32.totalorder %s315, %s329
      %p331 = scmp.eq.s32.totalorder %s43, 0
      %p332 = por %p330, %p331
      %s334 = sadd.s32 %s333, 1
      %p337 = scmp.eq.s32.totalorder %s37, 1
      %p338 = scmp.ne.s32.totalorder %s333, %s335
      %p339 = scmp.eq.s32.totalorder %s37, 0
      %p340 = por %p338, %p339
      %p341 = scmp.ne.s32.totalorder %s333, %s335
      %p342 = scmp.eq.s32.totalorder %s42, 1
      %p343 = por %p341, %p342
      %p344 = scmp.ne.s32.totalorder %s335, %s336
      %p345 = scmp.eq.s32.totalorder %s42, 0
      %p346 = por %p344, %p345
      %p347 = scmp.ne.s32.totalorder %s335, %s336
      %p348 = scmp.eq.s32.totalorder %s43, 1
      %p349 = por %p347, %p348
      %p351 = scmp.ne.s32.totalorder %s336, %s350
      %p352 = scmp.eq.s32.totalorder %s43, 0
      %p353 = por %p351, %p352
      %s355 = sadd.s32 %s354, 1
      %p358 = scmp.eq.s32.totalorder %s37, 1
      %p359 = scmp.ne.s32.totalorder %s354, %s356
      %p360 = scmp.eq.s32.totalorder %s37, 0
      %p361 = por %p359, %p360
      %p362 = scmp.ne.s32.totalorder %s354, %s356
      %p363 = scmp.eq.s32.totalorder %s42, 1
      %p364 = por %p362, %p363
      %p365 = scmp.ne.s32.totalorder %s356, %s357
      %p366 = scmp.eq.s32.totalorder %s42, 0
      %p367 = por %p365, %p366
      %p368 = scmp.ne.s32.totalorder %s356, %s357
      %p369 = scmp.eq.s32.totalorder %s43, 1
      %p370 = por %p368, %p369
      %p372 = scmp.ne.s32.totalorder %s357, %s371
      %p373 = scmp.eq.s32.totalorder %s43, 0
      %p374 = por %p372, %p373
      %s376 = sadd.s32 %s375, 1
      %p379 = scmp.eq.s32.totalorder %s37, 1
      %p380 = scmp.ne.s32.totalorder %s375, %s377
      %p381 = scmp.eq.s32.totalorder %s37, 0
      %p382 = por %p380, %p381
      %p383 = scmp.ne.s32.totalorder %s375, %s377
      %p384 = scmp.eq.s32.totalorder %s42, 1
      %p385 = por %p383, %p384
      %p386 = scmp.ne.s32.totalorder %s377, %s378
      %p387 = scmp.eq.s32.totalorder %s42, 0
      %p388 = por %p386, %p387
      %p389 = scmp.ne.s32.totalorder %s377, %s378
      %p390 = scmp.eq.s32.totalorder %s43, 1
      %p391 = por %p389, %p390
      %p393 = scmp.ne.s32.totalorder %s378, %s392
      %p394 = scmp.eq.s32.totalorder %s43, 0
      %p395 = por %p393, %p394
      %s397 = sadd.s32 %s396, 1
      %p400 = scmp.eq.s32.totalorder %s37, 1
      %p401 = scmp.ne.s32.totalorder %s396, %s398
      %p402 = scmp.eq.s32.totalorder %s37, 0
      %p403 = por %p401, %p402
      %p404 = scmp.ne.s32.totalorder %s396, %s398
      %p405 = scmp.eq.s32.totalorder %s42, 1
      %p406 = por %p404, %p405
      %p407 = scmp.ne.s32.totalorder %s398, %s399
      %p408 = scmp.eq.s32.totalorder %s42, 0
      %p409 = por %p407, %p408
      %p410 = scmp.ne.s32.totalorder %s398, %s399
      %p411 = scmp.eq.s32.totalorder %s43, 1
      %p412 = por %p410, %p411
      %p414 = scmp.ne.s32.totalorder %s399, %s413
      %p415 = scmp.eq.s32.totalorder %s43, 0
      %p416 = por %p414, %p415
      %s417 = ssub.s32 %s37, %s44
      %p418 = scmp.eq.s32.totalorder %s417, 0
      %s420 = sadd.s32 %s419, 1
      %s421 = scalar_select %p418, %s419, %s420
      %p424 = pneg %p418
      %p425 = scmp.eq.s32.totalorder %s37, 1
      %p426 = por %p424, %p425
      %p427 = scmp.ne.s32.totalorder %s419, %s422
      %p428 = scmp.eq.s32.totalorder %s37, 0
      %p429 = por %p427, %p428
      %p430 = scmp.ne.s32.totalorder %s419, %s422
      %p431 = scmp.eq.s32.totalorder %s42, 1
      %p432 = por %p430, %p431
      %p433 = scmp.ne.s32.totalorder %s422, %s423
      %p434 = scmp.eq.s32.totalorder %s42, 0
      %p435 = por %p433, %p434
      %p436 = scmp.ne.s32.totalorder %s422, %s423
      %p437 = scmp.eq.s32.totalorder %s43, 1
      %p438 = por %p436, %p437
      %p440 = scmp.ne.s32.totalorder %s423, %s439
      %p441 = scmp.eq.s32.totalorder %s43, 0
      %p442 = por %p440, %p441
      %s443 = ssub.s32 %s37, %s44
      %p444 = scmp.eq.s32.totalorder %s443, 0
      %s446 = sadd.s32 %s445, 1
      %s447 = scalar_select %p444, %s445, %s446
      %p450 = pneg %p444
      %p451 = scmp.eq.s32.totalorder %s37, 1
      %p452 = por %p450, %p451
      %p453 = scmp.ne.s32.totalorder %s445, %s448
      %p454 = scmp.eq.s32.totalorder %s37, 0
      %p455 = por %p453, %p454
      %p456 = scmp.ne.s32.totalorder %s445, %s448
      %p457 = scmp.eq.s32.totalorder %s42, 1
      %p458 = por %p456, %p457
      %p459 = scmp.ne.s32.totalorder %s448, %s449
      %p460 = scmp.eq.s32.totalorder %s42, 0
      %p461 = por %p459, %p460
      %p462 = scmp.ne.s32.totalorder %s448, %s449
      %p463 = scmp.eq.s32.totalorder %s43, 1
      %p464 = por %p462, %p463
      %p466 = scmp.ne.s32.totalorder %s449, %s465
      %p467 = scmp.eq.s32.totalorder %s43, 0
      %p468 = por %p466, %p467
      %p469 = scmp.le.s32.totalorder 1, %s37
      %p470 = scmp.lt.s32.totalorder %s37, 3
      %p471 = pnand %p469, %p470
      %p472 = pneg %p471
      // Predicated region
      $region9: #{cross_decoder_layer.1} parent=5 // pred_check
        _
      $region10: #{cross_decoder_layer.1} parent=5 // pred_check_branch
        %474 = sbr.rel (%p471) target = $region12
      $region11: #{cross_decoder_layer.1} parent=5 // pred_region
        %s475 = ssub.s32 %s37, 1
        // Predicated region
        $region13: #{cross_decoder_layer.1} parent=11 // pred_check
          %p476 = pneg %p136
        $region14: #{cross_decoder_layer.1} parent=11 // pred_check_branch
          %478 = sbr.rel (%p476) target = $region16
        $region15: #{cross_decoder_layer.1} parent=11 // pred_region
          _
        $region16: #{cross_decoder_layer.1} parent=11 // pred_fallthru
          _
        // Predicated region
        $region17: #{cross_decoder_layer.1} parent=11 // pred_check
          %p479 = pneg %p157
        $region18: #{cross_decoder_layer.1} parent=11 // pred_check_branch
          %481 = sbr.rel (%p479) target = $region20
        $region19: #{cross_decoder_layer.1} parent=11 // pred_region
          %s483 = ssub.s32 16, 16
          %484 = vsyncadd [#allocation3], %s483
          %s486 = sshll.u32 [#allocation2], 4
          %s487 = int_to_ptr.vmem [resolvable:$true] %s486
          %489 = dma.hbm_to_vmem [thread:$0]  %s4, 16, %s487, [#allocation3]
        $region20: #{cross_decoder_layer.1} parent=11 // pred_fallthru
          _
        // Predicated region
        $region21: #{cross_decoder_layer.1} parent=11 // pred_check
          %p490 = pneg %p178
        $region22: #{cross_decoder_layer.1} parent=11 // pred_check_branch
          %492 = sbr.rel (%p490) target = $region24
        $region23: #{cross_decoder_layer.1} parent=11 // pred_region
          _
        $region24: #{cross_decoder_layer.1} parent=11 // pred_fallthru
          _
        // Predicated region
        $region25: #{cross_decoder_layer.1} parent=11 // pred_check
          %p493 = pneg %p199
        $region26: #{cross_decoder_layer.1} parent=11 // pred_check_branch
          %495 = sbr.rel (%p493) target = $region28
        $region27: #{cross_decoder_layer.1} parent=11 // pred_region
          %s497 = ssub.s32 16, 16
          %498 = vsyncadd [#allocation6], %s497
          %s500 = sshll.u32 [#allocation5], 4
          %s501 = int_to_ptr.vmem [resolvable:$true] %s500
          %503 = dma.hbm_to_vmem [thread:$0]  %s6, 16, %s501, [#allocation6]
        $region28: #{cross_decoder_layer.1} parent=11 // pred_fallthru
          _
        // Predicated region
        $region29: #{cross_decoder_layer.1} parent=11 // pred_check
          %p504 = pneg %p220
        $region30: #{cross_decoder_layer.1} parent=11 // pred_check_branch
          %506 = sbr.rel (%p504) target = $region32
        $region31: #{cross_decoder_layer.1} parent=11 // pred_region
          %s508 = ssub.s32 256, 256
          %509 = vsyncadd [#allocation6], %s508
          %s510 = sshll.u32 [#allocation7], 4
          %s511 = int_to_ptr.vmem [resolvable:$true] %s510
          %516 = dma.hbm_to_vmem [thread:$0]  %s7, 256, %s511, [#allocation6], 64, 64, 4
        $region32: #{cross_decoder_layer.1} parent=11 // pred_fallthru
          _
        // Predicated region
        $region33: #{cross_decoder_layer.1} parent=11 // pred_check
          %p517 = pneg %p241
        $region34: #{cross_decoder_layer.1} parent=11 // pred_check_branch
          %519 = sbr.rel (%p517) target = $region36
        $region35: #{cross_decoder_layer.1} parent=11 // pred_region
          %s521 = ssub.s32 16, 16
          %522 = vsyncadd [#allocation9], %s521
          %s524 = sshll.u32 [#allocation8], 4
          %s525 = int_to_ptr.vmem [resolvable:$true] %s524
          %527 = dma.hbm_to_vmem [thread:$0]  %s8, 16, %s525, [#allocation9]
        $region36: #{cross_decoder_layer.1} parent=11 // pred_fallthru
          _
        // Predicated region
        $region37: #{cross_decoder_layer.1} parent=11 // pred_check
          %p528 = pneg %p262
        $region38: #{cross_decoder_layer.1} parent=11 // pred_check_branch
          %530 = sbr.rel (%p528) target = $region40
        $region39: #{cross_decoder_layer.1} parent=11 // pred_region
          %s532 = ssub.s32 16, 16
          %533 = vsyncadd [#allocation9], %s532
          %s535 = sshll.u32 [#allocation10], 4
          %s536 = int_to_ptr.vmem [resolvable:$true] %s535
          %538 = dma.hbm_to_vmem [thread:$0]  %s9, 16, %s536, [#allocation9]
        $region40: #{cross_decoder_layer.1} parent=11 // pred_fallthru
          _
        // Predicated region
        $region41: #{cross_decoder_layer.1} parent=11 // pred_check
          %p539 = pneg %p283
        $region42: #{cross_decoder_layer.1} parent=11 // pred_check_branch
          %541 = sbr.rel (%p539) target = $region44
        $region43: #{cross_decoder_layer.1} parent=11 // pred_region
          %s543 = ssub.s32 16, 16
          %544 = vsyncadd [#allocation12], %s543
          %s546 = sshll.u32 [#allocation11], 4
          %s547 = int_to_ptr.vmem [resolvable:$true] %s546
          %549 = dma.hbm_to_vmem [thread:$0]  %s10, 16, %s547, [#allocation12]
        $region44: #{cross_decoder_layer.1} parent=11 // pred_fallthru
          _
        // Predicated region
        $region45: #{cross_decoder_layer.1} parent=11 // pred_check
          %p550 = pneg %p304
        $region46: #{cross_decoder_layer.1} parent=11 // pred_check_branch
          %552 = sbr.rel (%p550) target = $region48
        $region47: #{cross_decoder_layer.1} parent=11 // pred_region
          %s554 = ssub.s32 256, 256
          %555 = vsyncadd [#allocation12], %s554
          %s556 = sshll.u32 [#allocation13], 4
          %s557 = int_to_ptr.vmem [resolvable:$true] %s556
          %562 = dma.hbm_to_vmem [thread:$0]  %s11, 256, %s557, [#allocation12], 64, 64, 4
        $region48: #{cross_decoder_layer.1} parent=11 // pred_fallthru
          _
        // Predicated region
        $region49: #{cross_decoder_layer.1} parent=11 // pred_check
          %p563 = pneg %p325
        $region50: #{cross_decoder_layer.1} parent=11 // pred_check_branch
          %565 = sbr.rel (%p563) target = $region52
        $region51: #{cross_decoder_layer.1} parent=11 // pred_region
          %s567 = ssub.s32 16, 16
          %568 = vsyncadd [#allocation15], %s567
          %s570 = sshll.u32 [#allocation14], 4
          %s571 = int_to_ptr.vmem [resolvable:$true] %s570
          %573 = dma.hbm_to_vmem [thread:$0]  %s12, 16, %s571, [#allocation15]
        $region52: #{cross_decoder_layer.1} parent=11 // pred_fallthru
          _
        // Predicated region
        $region53: #{cross_decoder_layer.1} parent=11 // pred_check
          %p574 = pneg %p346
        $region54: #{cross_decoder_layer.1} parent=11 // pred_check_branch
          %576 = sbr.rel (%p574) target = $region56
        $region55: #{cross_decoder_layer.1} parent=11 // pred_region
          %s578 = ssub.s32 256, 256
          %579 = vsyncadd [#allocation15], %s578
          %s580 = sshll.u32 [#allocation16], 4
          %s581 = int_to_ptr.vmem [resolvable:$true] %s580
          %586 = dma.hbm_to_vmem [thread:$0]  %s13, 256, %s581, [#allocation15], 64, 64, 4
        $region56: #{cross_decoder_layer.1} parent=11 // pred_fallthru
          _
        // Predicated region
        $region57: #{cross_decoder_layer.1} parent=11 // pred_check
          %p587 = pneg %p367
        $region58: #{cross_decoder_layer.1} parent=11 // pred_check_branch
          %589 = sbr.rel (%p587) target = $region60
        $region59: #{cross_decoder_layer.1} parent=11 // pred_region
          %s591 = ssub.s32 16, 16
          %592 = vsyncadd [#allocation18], %s591
          %s594 = sshll.u32 [#allocation17], 4
          %s595 = int_to_ptr.vmem [resolvable:$true] %s594
          %597 = dma.hbm_to_vmem [thread:$0]  %s14, 16, %s595, [#allocation18]
        $region60: #{cross_decoder_layer.1} parent=11 // pred_fallthru
          _
        // Predicated region
        $region61: #{cross_decoder_layer.1} parent=11 // pred_check
          %p598 = pneg %p388
        $region62: #{cross_decoder_layer.1} parent=11 // pred_check_branch
          %600 = sbr.rel (%p598) target = $region64
        $region63: #{cross_decoder_layer.1} parent=11 // pred_region
          _
        $region64: #{cross_decoder_layer.1} parent=11 // pred_fallthru
          _
        // Predicated region
        $region65: #{cross_decoder_layer.1} parent=11 // pred_check
          %p601 = pneg %p409
        $region66: #{cross_decoder_layer.1} parent=11 // pred_check_branch
          %603 = sbr.rel (%p601) target = $region68
        $region67: #{cross_decoder_layer.1} parent=11 // pred_region
          %s605 = ssub.s32 16, 16
          %606 = vsyncadd [#allocation18], %s605
          %s608 = sshll.u32 [#allocation19], 4
          %s609 = int_to_ptr.vmem [resolvable:$true] %s608
          %611 = dma.hbm_to_vmem [thread:$0]  %s16, 16, %s609, [#allocation18]
        $region68: #{cross_decoder_layer.1} parent=11 // pred_fallthru
          _
      $region12: #{cross_decoder_layer.1} parent=5 // pred_fallthru
        _
      %p612 = scmp.lt.s32.totalorder %s37, 2
      // Predicated region
      $region69: #{cross_decoder_layer.1} parent=5 // pred_check
        %p613 = pneg %p612
      $region70: #{cross_decoder_layer.1} parent=5 // pred_check_branch
        %615 = sbr.rel (%p613) target = $region72
      $region71: #{cross_decoder_layer.1} parent=5 // pred_region
        // Predicated region
        $region73: #{cross_decoder_layer.1} parent=71 // pred_check
          %p616 = pneg %p57
        $region74: #{cross_decoder_layer.1} parent=71 // pred_check_branch
          %618 = sbr.rel (%p616) target = $region76
        $region75: #{cross_decoder_layer.1} parent=71 // pred_region
          %p619 = scmp.lt.s32.totalorder %s37, 1
          %s620 = scalar_select %p619, %s37, 1
          %s621 = smul.addr %s620, 8
          %s622 = scalar_lea.vmem %s0, %s621
        $region76: #{cross_decoder_layer.1} parent=71 // pred_fallthru
          _
        // Predicated region
        $region77: #{cross_decoder_layer.1} parent=71 // pred_check
          %p623 = pneg %p83
        $region78: #{cross_decoder_layer.1} parent=71 // pred_check_branch
          %625 = sbr.rel (%p623) target = $region80
        $region79: #{cross_decoder_layer.1} parent=71 // pred_region
          %p626 = scmp.lt.s32.totalorder %s37, 1
          %s627 = scalar_select %p626, %s37, 1
          %s628 = smul.addr %s627, 8
          %s629 = scalar_lea.vmem %s1, %s628
        $region80: #{cross_decoder_layer.1} parent=71 // pred_fallthru
          _
        // Predicated region
        $region81: #{cross_decoder_layer.1} parent=71 // pred_check
          %p630 = pneg %p109
        $region82: #{cross_decoder_layer.1} parent=71 // pred_check_branch
          %632 = sbr.rel (%p630) target = $region84
        $region83: #{cross_decoder_layer.1} parent=71 // pred_region
          %p633 = scmp.lt.s32.totalorder %s37, 1
          %s634 = scalar_select %p633, %s37, 1
          %s635 = smul.addr %s634, 8
          %s636 = scalar_lea.vmem %s2, %s635
        $region84: #{cross_decoder_layer.1} parent=71 // pred_fallthru
          _
      $region72: #{cross_decoder_layer.1} parent=5 // pred_fallthru
        _
      %p637 = scmp.le.s32.totalorder 1, %s37
      %p638 = scmp.lt.s32.totalorder %s37, 3
      %p639 = pnand %p637, %p638
      %p640 = pneg %p639
      // Predicated region
      $region85: #{cross_decoder_layer.1} parent=5 // pred_check
        _
      $region86: #{cross_decoder_layer.1} parent=5 // pred_check_branch
        %642 = sbr.rel (%p639) target = $region88
      $region87: #{cross_decoder_layer.1} parent=5 // pred_region
        %s643 = ssub.s32 %s37, 1
        // Predicated region
        $region89: #{cross_decoder_layer.1} parent=87 // pred_check
          %p644 = pneg %p157
        $region90: #{cross_decoder_layer.1} parent=87 // pred_check_branch
          %646 = sbr.rel (%p644) target = $region92
        $region91: #{cross_decoder_layer.1} parent=87 // pred_region
          %647 = dma.done [#allocation3], 16
        $region92: #{cross_decoder_layer.1} parent=87 // pred_fallthru
          _
        // Predicated region
        $region93: #{cross_decoder_layer.1} parent=87 // pred_check
          %p648 = pneg %p199
        $region94: #{cross_decoder_layer.1} parent=87 // pred_check_branch
          %650 = sbr.rel (%p648) target = $region96
        $region95: #{cross_decoder_layer.1} parent=87 // pred_region
          %651 = dma.done [#allocation6], 16
        $region96: #{cross_decoder_layer.1} parent=87 // pred_fallthru
          _
        // Predicated region
        $region97: #{cross_decoder_layer.1} parent=87 // pred_check
          %p652 = pneg %p220
        $region98: #{cross_decoder_layer.1} parent=87 // pred_check_branch
          %654 = sbr.rel (%p652) target = $region100
        $region99: #{cross_decoder_layer.1} parent=87 // pred_region
          %655 = dma.done [#allocation6], 256
        $region100: #{cross_decoder_layer.1} parent=87 // pred_fallthru
          _
        // Predicated region
        $region101: #{cross_decoder_layer.1} parent=87 // pred_check
          %p656 = pneg %p241
        $region102: #{cross_decoder_layer.1} parent=87 // pred_check_branch
          %658 = sbr.rel (%p656) target = $region104
        $region103: #{cross_decoder_layer.1} parent=87 // pred_region
          %659 = dma.done [#allocation9], 16
        $region104: #{cross_decoder_layer.1} parent=87 // pred_fallthru
          _
        // Predicated region
        $region105: #{cross_decoder_layer.1} parent=87 // pred_check
          %p660 = pneg %p262
        $region106: #{cross_decoder_layer.1} parent=87 // pred_check_branch
          %662 = sbr.rel (%p660) target = $region108
        $region107: #{cross_decoder_layer.1} parent=87 // pred_region
          %663 = dma.done [#allocation9], 16
        $region108: #{cross_decoder_layer.1} parent=87 // pred_fallthru
          _
        // Predicated region
        $region109: #{cross_decoder_layer.1} parent=87 // pred_check
          %p664 = pneg %p283
        $region110: #{cross_decoder_layer.1} parent=87 // pred_check_branch
          %666 = sbr.rel (%p664) target = $region112
        $region111: #{cross_decoder_layer.1} parent=87 // pred_region
          %667 = dma.done [#allocation12], 16
        $region112: #{cross_decoder_layer.1} parent=87 // pred_fallthru
          _
        // Predicated region
        $region113: #{cross_decoder_layer.1} parent=87 // pred_check
          %p668 = pneg %p304
        $region114: #{cross_decoder_layer.1} parent=87 // pred_check_branch
          %670 = sbr.rel (%p668) target = $region116
        $region115: #{cross_decoder_layer.1} parent=87 // pred_region
          %671 = dma.done [#allocation12], 256
        $region116: #{cross_decoder_layer.1} parent=87 // pred_fallthru
          _
        // Predicated region
        $region117: #{cross_decoder_layer.1} parent=87 // pred_check
          %p672 = pneg %p325
        $region118: #{cross_decoder_layer.1} parent=87 // pred_check_branch
          %674 = sbr.rel (%p672) target = $region120
        $region119: #{cross_decoder_layer.1} parent=87 // pred_region
          %675 = dma.done [#allocation15], 16
        $region120: #{cross_decoder_layer.1} parent=87 // pred_fallthru
          _
        // Predicated region
        $region121: #{cross_decoder_layer.1} parent=87 // pred_check
          %p676 = pneg %p346
        $region122: #{cross_decoder_layer.1} parent=87 // pred_check_branch
          %678 = sbr.rel (%p676) target = $region124
        $region123: #{cross_decoder_layer.1} parent=87 // pred_region
          %679 = dma.done [#allocation15], 256
        $region124: #{cross_decoder_layer.1} parent=87 // pred_fallthru
          _
        // Predicated region
        $region125: #{cross_decoder_layer.1} parent=87 // pred_check
          %p680 = pneg %p367
        $region126: #{cross_decoder_layer.1} parent=87 // pred_check_branch
          %682 = sbr.rel (%p680) target = $region128
        $region127: #{cross_decoder_layer.1} parent=87 // pred_region
          %683 = dma.done [#allocation18], 16
        $region128: #{cross_decoder_layer.1} parent=87 // pred_fallthru
          _
        // Predicated region
        $region129: #{cross_decoder_layer.1} parent=87 // pred_check
          %p684 = pneg %p409
        $region130: #{cross_decoder_layer.1} parent=87 // pred_check_branch
          %686 = sbr.rel (%p684) target = $region132
        $region131: #{cross_decoder_layer.1} parent=87 // pred_region
          %687 = dma.done [#allocation18], 16
        $region132: #{cross_decoder_layer.1} parent=87 // pred_fallthru
          _
        %p688 = scmp.lt.s32.totalorder %s42, 1
        %s689 = scalar_select %p688, %s42, 1
        %s690 = smul.addr %s689, 8
        %s691 = scalar_lea.vmem %s0, %s690
        %p692 = pneg %p63
        %p693 = pneg %p60
        %p694 = scmp.lt.s32.totalorder %s42, 1
        %s695 = scalar_select %p694, %s42, 1
        %s696 = smul.addr %s695, 8
        %s697 = scalar_lea.vmem %s1, %s696
        %p698 = pneg %p89
        %p699 = pneg %p86
        %p700 = scmp.lt.s32.totalorder %s42, 1
        %s701 = scalar_select %p700, %s42, 1
        %s702 = smul.addr %s701, 8
        %s703 = scalar_lea.vmem %s2, %s702
        %p704 = pneg %p115
        %p705 = pneg %p112
        %p706 = pneg %p136
        %p707 = pneg %p133
        %p708 = pneg %p157
        %p709 = pneg %p154
        %p710 = pneg %p178
        %p711 = pneg %p175
        %p712 = pneg %p199
        %p713 = pneg %p196
        %p714 = pneg %p220
        %p715 = pneg %p217
        %p716 = pneg %p241
        %p717 = pneg %p238
        %p718 = pneg %p262
        %p719 = pneg %p259
        %p720 = pneg %p283
        %p721 = pneg %p280
        %p722 = pneg %p304
        %p723 = pneg %p301
        %p724 = pneg %p325
        %p725 = pneg %p322
        %p726 = pneg %p346
        %p727 = pneg %p343
        %p728 = pneg %p367
        %p729 = pneg %p364
        %p730 = pneg %p388
        %p731 = pneg %p385
        %p732 = pneg %p409
        %p733 = pneg %p406
        %p734 = pneg %p435
        %p735 = pneg %p432
        %s736 = sand.u32 %s422, 1
        %s737 = scalar_lea.sflag [#allocation4], %s736
        %s738 = sand.u32 %s422, 1
        %s739 = smul.addr %s738, 8
        %s740 = scalar_lea.vmem [#allocation20], %s739
        %p741 = pneg %p461
        %p742 = pneg %p458
        %s743 = sand.u32 %s448, 1
        %s744 = scalar_lea.sflag [#allocation22], %s743
        %s745 = sand.u32 %s448, 1
        %s746 = smul.addr %s745, 16
        %s747 = scalar_lea.vmem [#allocation21], %s746
        %p748 = scmp.lt.s32.totalorder %s42, 1
        %s749 = scalar_select %p748, %s42, 1
        %s750 = smul.addr %s749, 8
        %s751 = scalar_lea.vmem %s0, %s750
        %p752 = scmp.lt.s32.totalorder %s42, 1
        %s753 = scalar_select %p752, %s42, 1
        %s754 = smul.addr %s753, 8
        %s755 = scalar_lea.vmem %s1, %s754
        %p756 = scmp.lt.s32.totalorder %s42, 1
        %s757 = scalar_select %p756, %s42, 1
        %s758 = smul.addr %s757, 8
        %s759 = scalar_lea.vmem %s2, %s758
        %v761 = vld [vmem:[%s751] sm:$0xff]
        %v762 = vld [vmem:[%s755] sm:$0xff]
        %v763 = vpack.c.bf16 %v761, %v761
        %v764 = vld [vmem:[%s3] sm:$0xf]
        %v765 = vld [vmem:[%s3 + $0x4] sm:$0xf]
        %v766 = vld [vmem:[%s3 + $0x8] sm:$0xf]
        %v767 = vld [vmem:[%s3 + $0xc] sm:$0xf]
        %v768 = vld [vmem:[#allocation2] sm:$0x1]
        %v770 = vlaneseq
        %v771 = vshrl.u32 %v770, 7
        %v772 = vsub.s32 0, %v771
        %v773 = vrot.slane %v768, %v772
        %v779 = vunpack.c.l.b16 %v764
        %v780 = vunpack.c.l.b16 %v765
        %v781 = vunpack.c.l.b16 %v766
        %v782 = vunpack.c.l.b16 %v767
        %v783 = vpack.c.b16 %v780, %v779
        %v784 = vpack.c.b16 %v782, %v781
        %vm787 = vcmask 261120
        %v789 = vsel %vm787, %v763, 0
        %791 = vmatprep.subr.bf16.mxu0 0
        %792 = vmatpush1.bf16.msra.mxu0 %v783
        %793 = vmatprep.subr.bf16.mxu0 0
        %794 = vmatpush1.bf16.msra.mxu0 %v784
        %795 = vmatprep.subr.bf16.mxu0 0
        %796 = vmatpush1.bf16.msra.mxu0 0
        %797 = vmatprep.subr.bf16.mxu0 0
        %798 = vmatpush1.bf16.msra.mxu0 0
        %799 = vmatprep.subr.bf16.mxu0 0
        %800 = vmatpush1.bf16.msra.mxu0 0
        %801 = vmatprep.subr.bf16.mxu0 0
        %802 = vmatpush1.bf16.msra.mxu0 0
        %803 = vmatprep.subr.bf16.mxu0 0
        %804 = vmatpush1.bf16.msra.mxu0 0
        %805 = vmatprep.subr.bf16.mxu0 0
        %806 = vmatpush1.bf16.msra.mxu0 0
        %807 = vmatprep.subr.bf16.mxu0 0
        %808 = vmatpush1.bf16.msra.mxu0 0
        %809 = vmatprep.subr.bf16.mxu0 0
        %810 = vmatpush1.bf16.msra.mxu0 0
        %811 = vmatprep.subr.bf16.mxu0 0
        %812 = vmatpush1.bf16.msra.mxu0 0
        %813 = vmatprep.subr.bf16.mxu0 0
        %814 = vmatpush1.bf16.msra.mxu0 0
        %815 = vmatprep.subr.bf16.mxu0 0
        %816 = vmatpush1.bf16.msra.mxu0 0
        %817 = vmatprep.subr.bf16.mxu0 0
        %818 = vmatpush1.bf16.msra.mxu0 0
        %819 = vmatprep.subr.bf16.mxu0 0
        %820 = vmatpush1.bf16.msra.mxu0 0
        %821 = vmatprep.subr.bf16.mxu0 0
        %822 = vmatpush1.bf16.msra.mxu0 0
        %823 = vmatprep.mubr.bf16.mxu0 0
        %824 = vmatmul.mubr.bf16.gmra.mrb[0].mxu0 %v789
        %v825 = vpop.f32.mrb[0].mxu0
        %v826 = vadd.f32 %v773, %v825
        %v827 = vpop.f32.mrb[0].mxu0
        %v828 = vpop.f32.mrb[0].mxu0
        %v829 = vpop.f32.mrb[0].mxu0
        %830 = vdwg.mxu0
        %v831 = vpack.c.bf16 %v762, %v762
        %v832 = vld [vmem:[%s5] sm:$0xf]
        %v833 = vld [vmem:[%s5 + $0x4] sm:$0xf]
        %v834 = vld [vmem:[%s5 + $0x8] sm:$0xf]
        %v835 = vld [vmem:[%s5 + $0xc] sm:$0xf]
        %v836 = vld [vmem:[#allocation5] sm:$0x1]
        %v838 = vlaneseq
        %v839 = vshrl.u32 %v838, 7
        %v840 = vsub.s32 0, %v839
        %v841 = vrot.slane %v836, %v840
        %v847 = vunpack.c.l.b16 %v832
        %v848 = vunpack.c.l.b16 %v833
        %v849 = vunpack.c.l.b16 %v834
        %v850 = vunpack.c.l.b16 %v835
        %v851 = vpack.c.b16 %v848, %v847
        %v852 = vpack.c.b16 %v850, %v849
        %v856 = vsel %vm787, %v831, 0
        %858 = vmatprep.subr.bf16.mxu0 0
        %859 = vmatpush1.bf16.msra.mxu0 %v851
        %860 = vmatprep.subr.bf16.mxu0 0
        %861 = vmatpush1.bf16.msra.mxu0 %v852
        %862 = vmatprep.subr.bf16.mxu0 0
        %863 = vmatpush1.bf16.msra.mxu0 0
        %864 = vmatprep.subr.bf16.mxu0 0
        %865 = vmatpush1.bf16.msra.mxu0 0
        %866 = vmatprep.subr.bf16.mxu0 0
        %867 = vmatpush1.bf16.msra.mxu0 0
        %868 = vmatprep.subr.bf16.mxu0 0
        %869 = vmatpush1.bf16.msra.mxu0 0
        %870 = vmatprep.subr.bf16.mxu0 0
        %871 = vmatpush1.bf16.msra.mxu0 0
        %872 = vmatprep.subr.bf16.mxu0 0
        %873 = vmatpush1.bf16.msra.mxu0 0
        %874 = vmatprep.subr.bf16.mxu0 0
        %875 = vmatpush1.bf16.msra.mxu0 0
        %876 = vmatprep.subr.bf16.mxu0 0
        %877 = vmatpush1.bf16.msra.mxu0 0
        %878 = vmatprep.subr.bf16.mxu0 0
        %879 = vmatpush1.bf16.msra.mxu0 0
        %880 = vmatprep.subr.bf16.mxu0 0
        %881 = vmatpush1.bf16.msra.mxu0 0
        %882 = vmatprep.subr.bf16.mxu0 0
        %883 = vmatpush1.bf16.msra.mxu0 0
        %884 = vmatprep.subr.bf16.mxu0 0
        %885 = vmatpush1.bf16.msra.mxu0 0
        %886 = vmatprep.subr.bf16.mxu0 0
        %887 = vmatpush1.bf16.msra.mxu0 0
        %888 = vmatprep.subr.bf16.mxu0 0
        %889 = vmatpush1.bf16.msra.mxu0 0
        %890 = vmatprep.mubr.bf16.mxu0 0
        %891 = vmatmul.mubr.bf16.gmra.mrb[0].mxu0 %v856
        %v892 = vpop.f32.mrb[0].mxu0
        %v893 = vadd.f32 %v841, %v892
        %v894 = vpop.f32.mrb[0].mxu0
        %v895 = vpop.f32.mrb[0].mxu0
        %v896 = vpop.f32.mrb[0].mxu0
        %897 = vdwg.mxu0
        %v898 = vpack.c.bf16 %v826, %v826
        %v899 = vpack.c.bf16 %v893, %v893
        %vm900 = vcmask 64512
        %v902 = vsel %vm900, %v898, 0
        %v905 = vsel %vm900, %v899, 0
        %907 = vmatprep.subr.bf16.mxu0 0
        %908 = vmatpush1.bf16.xpose.msra.mxu0 %v905
        %909 = vmatprep.subr.bf16.mxu0 0
        %910 = vmatpush1.bf16.xpose.msra.mxu0 0
        %911 = vmatprep.subr.bf16.mxu0 0
        %912 = vmatpush1.bf16.xpose.msra.mxu0 0
        %913 = vmatprep.subr.bf16.mxu0 0
        %914 = vmatpush1.bf16.xpose.msra.mxu0 0
        %915 = vmatprep.subr.bf16.mxu0 0
        %916 = vmatpush1.bf16.xpose.msra.mxu0 0
        %917 = vmatprep.subr.bf16.mxu0 0
        %918 = vmatpush1.bf16.xpose.msra.mxu0 0
        %919 = vmatprep.subr.bf16.mxu0 0
        %920 = vmatpush1.bf16.xpose.msra.mxu0 0
        %921 = vmatprep.subr.bf16.mxu0 0
        %922 = vmatpush1.bf16.xpose.msra.mxu0 0
        %923 = vmatprep.subr.bf16.mxu0 0
        %924 = vmatpush1.bf16.xpose.msra.mxu0 0
        %925 = vmatprep.subr.bf16.mxu0 0
        %926 = vmatpush1.bf16.xpose.msra.mxu0 0
        %927 = vmatprep.subr.bf16.mxu0 0
        %928 = vmatpush1.bf16.xpose.msra.mxu0 0
        %929 = vmatprep.subr.bf16.mxu0 0
        %930 = vmatpush1.bf16.xpose.msra.mxu0 0
        %931 = vmatprep.subr.bf16.mxu0 0
        %932 = vmatpush1.bf16.xpose.msra.mxu0 0
        %933 = vmatprep.subr.bf16.mxu0 0
        %934 = vmatpush1.bf16.xpose.msra.mxu0 0
        %935 = vmatprep.subr.bf16.mxu0 0
        %936 = vmatpush1.bf16.xpose.msra.mxu0 0
        %937 = vmatprep.subr.bf16.mxu0 0
        %938 = vmatpush1.bf16.xpose.msra.mxu0 0
        %939 = vmatprep.mubr.bf16.mxu0 0
        %940 = vmatmul.mubr.bf16.gmra.mrb[0].mxu0 %v902
        %v941 = vpop.f32.mrb[0].mxu0
        %v942 = vadd.f32 0.0, %v941
        %v943 = vpop.f32.mrb[0].mxu0
        %v944 = vpop.f32.mrb[0].mxu0
        %v945 = vpop.f32.mrb[0].mxu0
        %946 = vdwg.mxu0
        %v947 = vsel %vm900, %v942, -inf
        %948 = vmax.xlane.f32.xlu0 %v947
        %v949 = vpop.xlane.xlu0 %948
        %v950 = vsub.f32 %v942, %v949
        %v951 = vmul.f32 %v950, 1.442695
        %v952 = vpow.pop %v951
        %v953 = vsel %vm900, %v952, 0.0
        %954 = vadd.xlane.f32.xlu0 %v953
        %v955 = vpop.xlane.xlu0 %954
        %v956 = vrcp.pop %v955
        %v957 = vmul.f32 %v952, %v956
        %v958 = vpack.c.bf16 %v957, %v957
        %vm959 = vcmask 60416
        %960 = vst.msk [vmem:[%s747] sm:$0xf] %vm959, %v958
        %962 = vrot.lane.b32.xlu0 %v899, 96
        %v963 = vpop.permute.xlu0 %962
        %v965 = vsel %vm900, %v958, 0
        %vm967 = vcmask 1043456
        %v969 = vsel %vm967, %v963, 0
        %971 = vmatprep.subr.bf16.mxu0 0
        %972 = vmatpush1.bf16.msra.mxu0 %v969
        %973 = vmatprep.subr.bf16.mxu0 0
        %974 = vmatpush1.bf16.msra.mxu0 0
        %975 = vmatprep.subr.bf16.mxu0 0
        %976 = vmatpush1.bf16.msra.mxu0 0
        %977 = vmatprep.subr.bf16.mxu0 0
        %978 = vmatpush1.bf16.msra.mxu0 0
        %979 = vmatprep.subr.bf16.mxu0 0
        %980 = vmatpush1.bf16.msra.mxu0 0
        %981 = vmatprep.subr.bf16.mxu0 0
        %982 = vmatpush1.bf16.msra.mxu0 0
        %983 = vmatprep.subr.bf16.mxu0 0
        %984 = vmatpush1.bf16.msra.mxu0 0
        %985 = vmatprep.subr.bf16.mxu0 0
        %986 = vmatpush1.bf16.msra.mxu0 0
        %987 = vmatprep.subr.bf16.mxu0 0
        %988 = vmatpush1.bf16.msra.mxu0 0
        %989 = vmatprep.subr.bf16.mxu0 0
        %990 = vmatpush1.bf16.msra.mxu0 0
        %991 = vmatprep.subr.bf16.mxu0 0
        %992 = vmatpush1.bf16.msra.mxu0 0
        %993 = vmatprep.subr.bf16.mxu0 0
        %994 = vmatpush1.bf16.msra.mxu0 0
        %995 = vmatprep.subr.bf16.mxu0 0
        %996 = vmatpush1.bf16.msra.mxu0 0
        %997 = vmatprep.subr.bf16.mxu0 0
        %998 = vmatpush1.bf16.msra.mxu0 0
        %999 = vmatprep.subr.bf16.mxu0 0
        %1000 = vmatpush1.bf16.msra.mxu0 0
        %1001 = vmatprep.subr.bf16.mxu0 0
        %1002 = vmatpush1.bf16.msra.mxu0 0
        %1003 = vmatprep.mubr.bf16.mxu0 0
        %1004 = vmatmul.mubr.bf16.gmra.mrb[0].mxu0 %v965
        %v1005 = vpop.f32.mrb[0].mxu0
        %v1006 = vadd.f32 0.0, %v1005
        %v1007 = vpop.f32.mrb[0].mxu0
        %v1008 = vpop.f32.mrb[0].mxu0
        %v1009 = vpop.f32.mrb[0].mxu0
        %1010 = vdwg.mxu0
        %v1011 = vpack.c.bf16 %v1006, %v1006
        %v1012 = vld [vmem:[#allocation7] sm:$0xf]
        %1014 = vrot.lane.b32.xlu0 %v898, 120
        %v1015 = vpop.permute.xlu0 %1014
        %1016 = vrot.lane.b32.xlu0 %v899, 120
        %v1017 = vpop.permute.xlu0 %1016
        %v1019 = vsel %vm900, %v1015, 0
        %v1022 = vsel %vm900, %v1017, 0
        %1024 = vmatprep.subr.bf16.mxu0 0
        %1025 = vmatpush1.bf16.xpose.msra.mxu0 %v1022
        %1026 = vmatprep.subr.bf16.mxu0 0
        %1027 = vmatpush1.bf16.xpose.msra.mxu0 0
        %1028 = vmatprep.subr.bf16.mxu0 0
        %1029 = vmatpush1.bf16.xpose.msra.mxu0 0
        %1030 = vmatprep.subr.bf16.mxu0 0
        %1031 = vmatpush1.bf16.xpose.msra.mxu0 0
        %1032 = vmatprep.subr.bf16.mxu0 0
        %1033 = vmatpush1.bf16.xpose.msra.mxu0 0
        %1034 = vmatprep.subr.bf16.mxu0 0
        %1035 = vmatpush1.bf16.xpose.msra.mxu0 0
        %1036 = vmatprep.subr.bf16.mxu0 0
        %1037 = vmatpush1.bf16.xpose.msra.mxu0 0
        %1038 = vmatprep.subr.bf16.mxu0 0
        %1039 = vmatpush1.bf16.xpose.msra.mxu0 0
        %1040 = vmatprep.subr.bf16.mxu0 0
        %1041 = vmatpush1.bf16.xpose.msra.mxu0 0
        %1042 = vmatprep.subr.bf16.mxu0 0
        %1043 = vmatpush1.bf16.xpose.msra.mxu0 0
        %1044 = vmatprep.subr.bf16.mxu0 0
        %1045 = vmatpush1.bf16.xpose.msra.mxu0 0
        %1046 = vmatprep.subr.bf16.mxu0 0
        %1047 = vmatpush1.bf16.xpose.msra.mxu0 0
        %1048 = vmatprep.subr.bf16.mxu0 0
        %1049 = vmatpush1.bf16.xpose.msra.mxu0 0
        %1050 = vmatprep.subr.bf16.mxu0 0
        %1051 = vmatpush1.bf16.xpose.msra.mxu0 0
        %1052 = vmatprep.subr.bf16.mxu0 0
        %1053 = vmatpush1.bf16.xpose.msra.mxu0 0
        %1054 = vmatprep.subr.bf16.mxu0 0
        %1055 = vmatpush1.bf16.xpose.msra.mxu0 0
        %1056 = vmatprep.mubr.bf16.mxu0 0
        %1057 = vmatmul.mubr.bf16.gmra.mrb[0].mxu0 %v1019
        %v1058 = vpop.f32.mrb[0].mxu0
        %v1059 = vadd.f32 0.0, %v1058
        %v1060 = vpop.f32.mrb[0].mxu0
        %v1061 = vpop.f32.mrb[0].mxu0
        %v1062 = vpop.f32.mrb[0].mxu0
        %1063 = vdwg.mxu0
        %v1064 = vsel %vm900, %v1059, -inf
        %1065 = vmax.xlane.f32.xlu0 %v1064
        %v1066 = vpop.xlane.xlu0 %1065
        %v1067 = vsub.f32 %v1059, %v1066
        %v1068 = vmul.f32 %v1067, 1.442695
        %v1069 = vpow.pop %v1068
        %v1070 = vsel %vm900, %v1069, 0.0
        %1071 = vadd.xlane.f32.xlu0 %v1070
        %v1072 = vpop.xlane.xlu0 %1071
        %v1073 = vrcp.pop %v1072
        %v1074 = vmul.f32 %v1069, %v1073
        %v1075 = vpack.c.bf16 %v1074, %v1074
        %s1076 = scalar_lea.vmem %s747, 4 [#allocation21]
        %1077 = vst.msk [vmem:[%s1076] sm:$0xf] %vm959, %v1075
        %1078 = vrot.lane.b32.xlu0 %v899, 88
        %v1079 = vpop.permute.xlu0 %1078
        %v1081 = vsel %vm900, %v1075, 0
        %v1084 = vsel %vm967, %v1079, 0
        %1086 = vmatprep.subr.bf16.mxu0 0
        %1087 = vmatpush1.bf16.msra.mxu0 %v1084
        %1088 = vmatprep.subr.bf16.mxu0 0
        %1089 = vmatpush1.bf16.msra.mxu0 0
        %1090 = vmatprep.subr.bf16.mxu0 0
        %1091 = vmatpush1.bf16.msra.mxu0 0
        %1092 = vmatprep.subr.bf16.mxu0 0
        %1093 = vmatpush1.bf16.msra.mxu0 0
        %1094 = vmatprep.subr.bf16.mxu0 0
        %1095 = vmatpush1.bf16.msra.mxu0 0
        %1096 = vmatprep.subr.bf16.mxu0 0
        %1097 = vmatpush1.bf16.msra.mxu0 0
        %1098 = vmatprep.subr.bf16.mxu0 0
        %1099 = vmatpush1.bf16.msra.mxu0 0
        %1100 = vmatprep.subr.bf16.mxu0 0
        %1101 = vmatpush1.bf16.msra.mxu0 0
        %1102 = vmatprep.subr.bf16.mxu0 0
        %1103 = vmatpush1.bf16.msra.mxu0 0
        %1104 = vmatprep.subr.bf16.mxu0 0
        %1105 = vmatpush1.bf16.msra.mxu0 0
        %1106 = vmatprep.subr.bf16.mxu0 0
        %1107 = vmatpush1.bf16.msra.mxu0 0
        %1108 = vmatprep.subr.bf16.mxu0 0
        %1109 = vmatpush1.bf16.msra.mxu0 0
        %1110 = vmatprep.subr.bf16.mxu0 0
        %1111 = vmatpush1.bf16.msra.mxu0 0
        %1112 = vmatprep.subr.bf16.mxu0 0
        %1113 = vmatpush1.bf16.msra.mxu0 0
        %1114 = vmatprep.subr.bf16.mxu0 0
        %1115 = vmatpush1.bf16.msra.mxu0 0
        %1116 = vmatprep.subr.bf16.mxu0 0
        %1117 = vmatpush1.bf16.msra.mxu0 0
        %1118 = vmatprep.mubr.bf16.mxu0 0
        %1119 = vmatmul.mubr.bf16.gmra.mrb[0].mxu0 %v1081
        %v1120 = vpop.f32.mrb[0].mxu0
        %v1121 = vadd.f32 0.0, %v1120
        %v1122 = vpop.f32.mrb[0].mxu0
        %v1123 = vpop.f32.mrb[0].mxu0
        %v1124 = vpop.f32.mrb[0].mxu0
        %1125 = vdwg.mxu0
        %v1126 = vpack.c.bf16 %v1121, %v1121
        %s1127 = scalar_lea.vmem [#allocation7], 4
        %v1128 = vld [vmem:[%s1127] sm:$0xf]
        %v1130 = vsel %vm900, %v1126, 0
        %v1133 = vsel %vm967, %v1128, 0
        %1135 = vmatprep.subr.bf16.mxu0 0
        %1136 = vmatpush1.bf16.msra.mxu0 %v1133
        %1137 = vmatprep.subr.bf16.mxu0 0
        %1138 = vmatpush1.bf16.msra.mxu0 0
        %1139 = vmatprep.subr.bf16.mxu0 0
        %1140 = vmatpush1.bf16.msra.mxu0 0
        %1141 = vmatprep.subr.bf16.mxu0 0
        %1142 = vmatpush1.bf16.msra.mxu0 0
        %1143 = vmatprep.subr.bf16.mxu0 0
        %1144 = vmatpush1.bf16.msra.mxu0 0
        %1145 = vmatprep.subr.bf16.mxu0 0
        %1146 = vmatpush1.bf16.msra.mxu0 0
        %1147 = vmatprep.subr.bf16.mxu0 0
        %1148 = vmatpush1.bf16.msra.mxu0 0
        %1149 = vmatprep.subr.bf16.mxu0 0
        %1150 = vmatpush1.bf16.msra.mxu0 0
        %1151 = vmatprep.subr.bf16.mxu0 0
        %1152 = vmatpush1.bf16.msra.mxu0 0
        %1153 = vmatprep.subr.bf16.mxu0 0
        %1154 = vmatpush1.bf16.msra.mxu0 0
        %1155 = vmatprep.subr.bf16.mxu0 0
        %1156 = vmatpush1.bf16.msra.mxu0 0
        %1157 = vmatprep.subr.bf16.mxu0 0
        %1158 = vmatpush1.bf16.msra.mxu0 0
        %1159 = vmatprep.subr.bf16.mxu0 0
        %1160 = vmatpush1.bf16.msra.mxu0 0
        %1161 = vmatprep.subr.bf16.mxu0 0
        %1162 = vmatpush1.bf16.msra.mxu0 0
        %1163 = vmatprep.subr.bf16.mxu0 0
        %1164 = vmatpush1.bf16.msra.mxu0 0
        %1165 = vmatprep.subr.bf16.mxu0 0
        %1166 = vmatpush1.bf16.msra.mxu0 0
        %1167 = vmatprep.mubr.bf16.mxu0 0
        %1168 = vmatmul.mubr.bf16.gmra.mrb[0].mxu0 %v1130
        %v1169 = vpop.f32.mrb[0].mxu0
        %v1170 = vadd.f32 0.0, %v1169
        %v1171 = vpop.f32.mrb[0].mxu0
        %v1172 = vpop.f32.mrb[0].mxu0
        %v1173 = vpop.f32.mrb[0].mxu0
        %1174 = vdwg.mxu0
        %v1176 = vsel %vm900, %v1011, 0
        %v1179 = vsel %vm967, %v1012, 0
        %1181 = vmatprep.subr.bf16.mxu0 0
        %1182 = vmatpush1.bf16.msra.mxu0 %v1179
        %1183 = vmatprep.subr.bf16.mxu0 0
        %1184 = vmatpush1.bf16.msra.mxu0 0
        %1185 = vmatprep.subr.bf16.mxu0 0
        %1186 = vmatpush1.bf16.msra.mxu0 0
        %1187 = vmatprep.subr.bf16.mxu0 0
        %1188 = vmatpush1.bf16.msra.mxu0 0
        %1189 = vmatprep.subr.bf16.mxu0 0
        %1190 = vmatpush1.bf16.msra.mxu0 0
        %1191 = vmatprep.subr.bf16.mxu0 0
        %1192 = vmatpush1.bf16.msra.mxu0 0
        %1193 = vmatprep.subr.bf16.mxu0 0
        %1194 = vmatpush1.bf16.msra.mxu0 0
        %1195 = vmatprep.subr.bf16.mxu0 0
        %1196 = vmatpush1.bf16.msra.mxu0 0
        %1197 = vmatprep.subr.bf16.mxu0 0
        %1198 = vmatpush1.bf16.msra.mxu0 0
        %1199 = vmatprep.subr.bf16.mxu0 0
        %1200 = vmatpush1.bf16.msra.mxu0 0
        %1201 = vmatprep.subr.bf16.mxu0 0
        %1202 = vmatpush1.bf16.msra.mxu0 0
        %1203 = vmatprep.subr.bf16.mxu0 0
        %1204 = vmatpush1.bf16.msra.mxu0 0
        %1205 = vmatprep.subr.bf16.mxu0 0
        %1206 = vmatpush1.bf16.msra.mxu0 0
        %1207 = vmatprep.subr.bf16.mxu0 0
        %1208 = vmatpush1.bf16.msra.mxu0 0
        %1209 = vmatprep.subr.bf16.mxu0 0
        %1210 = vmatpush1.bf16.msra.mxu0 0
        %1211 = vmatprep.subr.bf16.mxu0 0
        %1212 = vmatpush1.bf16.msra.mxu0 0
        %1213 = vmatprep.mubr.bf16.mxu0 0
        %1214 = vmatmul.mubr.bf16.gmra.mrb[0].mxu0 %v1176
        %v1215 = vpop.f32.mrb[0].mxu0
        %v1216 = vadd.f32 %v1170, %v1215
        %v1217 = vpop.f32.mrb[0].mxu0
        %v1218 = vpop.f32.mrb[0].mxu0
        %v1219 = vpop.f32.mrb[0].mxu0
        %1220 = vdwg.mxu0
        %1221 = vrot.lane.b32.xlu0 %v898, 112
        %v1222 = vpop.permute.xlu0 %1221
        %1223 = vrot.lane.b32.xlu0 %v899, 112
        %v1224 = vpop.permute.xlu0 %1223
        %v1226 = vsel %vm900, %v1222, 0
        %v1229 = vsel %vm900, %v1224, 0
        %1231 = vmatprep.subr.bf16.mxu0 0
        %1232 = vmatpush1.bf16.xpose.msra.mxu0 %v1229
        %1233 = vmatprep.subr.bf16.mxu0 0
        %1234 = vmatpush1.bf16.xpose.msra.mxu0 0
        %1235 = vmatprep.subr.bf16.mxu0 0
        %1236 = vmatpush1.bf16.xpose.msra.mxu0 0
        %1237 = vmatprep.subr.bf16.mxu0 0
        %1238 = vmatpush1.bf16.xpose.msra.mxu0 0
        %1239 = vmatprep.subr.bf16.mxu0 0
        %1240 = vmatpush1.bf16.xpose.msra.mxu0 0
        %1241 = vmatprep.subr.bf16.mxu0 0
        %1242 = vmatpush1.bf16.xpose.msra.mxu0 0
        %1243 = vmatprep.subr.bf16.mxu0 0
        %1244 = vmatpush1.bf16.xpose.msra.mxu0 0
        %1245 = vmatprep.subr.bf16.mxu0 0
        %1246 = vmatpush1.bf16.xpose.msra.mxu0 0
        %1247 = vmatprep.subr.bf16.mxu0 0
        %1248 = vmatpush1.bf16.xpose.msra.mxu0 0
        %1249 = vmatprep.subr.bf16.mxu0 0
        %1250 = vmatpush1.bf16.xpose.msra.mxu0 0
        %1251 = vmatprep.subr.bf16.mxu0 0
        %1252 = vmatpush1.bf16.xpose.msra.mxu0 0
        %1253 = vmatprep.subr.bf16.mxu0 0
        %1254 = vmatpush1.bf16.xpose.msra.mxu0 0
        %1255 = vmatprep.subr.bf16.mxu0 0
        %1256 = vmatpush1.bf16.xpose.msra.mxu0 0
        %1257 = vmatprep.subr.bf16.mxu0 0
        %1258 = vmatpush1.bf16.xpose.msra.mxu0 0
        %1259 = vmatprep.subr.bf16.mxu0 0
        %1260 = vmatpush1.bf16.xpose.msra.mxu0 0
        %1261 = vmatprep.subr.bf16.mxu0 0
        %1262 = vmatpush1.bf16.xpose.msra.mxu0 0
        %1263 = vmatprep.mubr.bf16.mxu0 0
        %1264 = vmatmul.mubr.bf16.gmra.mrb[0].mxu0 %v1226
        %v1265 = vpop.f32.mrb[0].mxu0
        %v1266 = vadd.f32 0.0, %v1265
        %v1267 = vpop.f32.mrb[0].mxu0
        %v1268 = vpop.f32.mrb[0].mxu0
        %v1269 = vpop.f32.mrb[0].mxu0
        %1270 = vdwg.mxu0
        %v1271 = vsel %vm900, %v1266, -inf
        %1272 = vmax.xlane.f32.xlu0 %v1271
        %v1273 = vpop.xlane.xlu0 %1272
        %v1274 = vsub.f32 %v1266, %v1273
        %v1275 = vmul.f32 %v1274, 1.442695
        %v1276 = vpow.pop %v1275
        %v1277 = vsel %vm900, %v1276, 0.0
        %1278 = vadd.xlane.f32.xlu0 %v1277
        %v1279 = vpop.xlane.xlu0 %1278
        %v1280 = vrcp.pop %v1279
        %v1281 = vmul.f32 %v1276, %v1280
        %v1282 = vpack.c.bf16 %v1281, %v1281
        %s1283 = scalar_lea.vmem %s747, 8 [#allocation21]
        %1284 = vst.msk [vmem:[%s1283] sm:$0xf] %vm959, %v1282
        %1285 = vrot.lane.b32.xlu0 %v899, 80
        %v1286 = vpop.permute.xlu0 %1285
        %v1288 = vsel %vm900, %v1282, 0
        %v1291 = vsel %vm967, %v1286, 0
        %1293 = vmatprep.subr.bf16.mxu0 0
        %1294 = vmatpush1.bf16.msra.mxu0 %v1291
        %1295 = vmatprep.subr.bf16.mxu0 0
        %1296 = vmatpush1.bf16.msra.mxu0 0
        %1297 = vmatprep.subr.bf16.mxu0 0
        %1298 = vmatpush1.bf16.msra.mxu0 0
        %1299 = vmatprep.subr.bf16.mxu0 0
        %1300 = vmatpush1.bf16.msra.mxu0 0
        %1301 = vmatprep.subr.bf16.mxu0 0
        %1302 = vmatpush1.bf16.msra.mxu0 0
        %1303 = vmatprep.subr.bf16.mxu0 0
        %1304 = vmatpush1.bf16.msra.mxu0 0
        %1305 = vmatprep.subr.bf16.mxu0 0
        %1306 = vmatpush1.bf16.msra.mxu0 0
        %1307 = vmatprep.subr.bf16.mxu0 0
        %1308 = vmatpush1.bf16.msra.mxu0 0
        %1309 = vmatprep.subr.bf16.mxu0 0
        %1310 = vmatpush1.bf16.msra.mxu0 0
        %1311 = vmatprep.subr.bf16.mxu0 0
        %1312 = vmatpush1.bf16.msra.mxu0 0
        %1313 = vmatprep.subr.bf16.mxu0 0
        %1314 = vmatpush1.bf16.msra.mxu0 0
        %1315 = vmatprep.subr.bf16.mxu0 0
        %1316 = vmatpush1.bf16.msra.mxu0 0
        %1317 = vmatprep.subr.bf16.mxu0 0
        %1318 = vmatpush1.bf16.msra.mxu0 0
        %1319 = vmatprep.subr.bf16.mxu0 0
        %1320 = vmatpush1.bf16.msra.mxu0 0
        %1321 = vmatprep.subr.bf16.mxu0 0
        %1322 = vmatpush1.bf16.msra.mxu0 0
        %1323 = vmatprep.subr.bf16.mxu0 0
        %1324 = vmatpush1.bf16.msra.mxu0 0
        %1325 = vmatprep.mubr.bf16.mxu0 0
        %1326 = vmatmul.mubr.bf16.gmra.mrb[0].mxu0 %v1288
        %v1327 = vpop.f32.mrb[0].mxu0
        %v1328 = vadd.f32 0.0, %v1327
        %v1329 = vpop.f32.mrb[0].mxu0
        %v1330 = vpop.f32.mrb[0].mxu0
        %v1331 = vpop.f32.mrb[0].mxu0
        %1332 = vdwg.mxu0
        %v1333 = vpack.c.bf16 %v1328, %v1328
        %s1334 = scalar_lea.vmem [#allocation7], 8
        %v1335 = vld [vmem:[%s1334] sm:$0xf]
        %v1337 = vsel %vm900, %v1333, 0
        %v1340 = vsel %vm967, %v1335, 0
        %1342 = vmatprep.subr.bf16.mxu0 0
        %1343 = vmatpush1.bf16.msra.mxu0 %v1340
        %1344 = vmatprep.subr.bf16.mxu0 0
        %1345 = vmatpush1.bf16.msra.mxu0 0
        %1346 = vmatprep.subr.bf16.mxu0 0
        %1347 = vmatpush1.bf16.msra.mxu0 0
        %1348 = vmatprep.subr.bf16.mxu0 0
        %1349 = vmatpush1.bf16.msra.mxu0 0
        %1350 = vmatprep.subr.bf16.mxu0 0
        %1351 = vmatpush1.bf16.msra.mxu0 0
        %1352 = vmatprep.subr.bf16.mxu0 0
        %1353 = vmatpush1.bf16.msra.mxu0 0
        %1354 = vmatprep.subr.bf16.mxu0 0
        %1355 = vmatpush1.bf16.msra.mxu0 0
        %1356 = vmatprep.subr.bf16.mxu0 0
        %1357 = vmatpush1.bf16.msra.mxu0 0
        %1358 = vmatprep.subr.bf16.mxu0 0
        %1359 = vmatpush1.bf16.msra.mxu0 0
        %1360 = vmatprep.subr.bf16.mxu0 0
        %1361 = vmatpush1.bf16.msra.mxu0 0
        %1362 = vmatprep.subr.bf16.mxu0 0
        %1363 = vmatpush1.bf16.msra.mxu0 0
        %1364 = vmatprep.subr.bf16.mxu0 0
        %1365 = vmatpush1.bf16.msra.mxu0 0
        %1366 = vmatprep.subr.bf16.mxu0 0
        %1367 = vmatpush1.bf16.msra.mxu0 0
        %1368 = vmatprep.subr.bf16.mxu0 0
        %1369 = vmatpush1.bf16.msra.mxu0 0
        %1370 = vmatprep.subr.bf16.mxu0 0
        %1371 = vmatpush1.bf16.msra.mxu0 0
        %1372 = vmatprep.subr.bf16.mxu0 0
        %1373 = vmatpush1.bf16.msra.mxu0 0
        %1374 = vmatprep.mubr.bf16.mxu0 0
        %1375 = vmatmul.mubr.bf16.gmra.mrb[0].mxu0 %v1337
        %v1376 = vpop.f32.mrb[0].mxu0
        %v1377 = vadd.f32 0.0, %v1376
        %v1378 = vpop.f32.mrb[0].mxu0
        %v1379 = vpop.f32.mrb[0].mxu0
        %v1380 = vpop.f32.mrb[0].mxu0
        %1381 = vdwg.mxu0
        %v1382 = vadd.f32 %v1216, %v1377
        %1383 = vrot.lane.b32.xlu0 %v898, 104
        %v1384 = vpop.permute.xlu0 %1383
        %1385 = vrot.lane.b32.xlu0 %v899, 104
        %v1386 = vpop.permute.xlu0 %1385
        %v1388 = vsel %vm900, %v1384, 0
        %v1391 = vsel %vm900, %v1386, 0
        %1393 = vmatprep.subr.bf16.mxu0 0
        %1394 = vmatpush1.bf16.xpose.msra.mxu0 %v1391
        %1395 = vmatprep.subr.bf16.mxu0 0
        %1396 = vmatpush1.bf16.xpose.msra.mxu0 0
        %1397 = vmatprep.subr.bf16.mxu0 0
        %1398 = vmatpush1.bf16.xpose.msra.mxu0 0
        %1399 = vmatprep.subr.bf16.mxu0 0
        %1400 = vmatpush1.bf16.xpose.msra.mxu0 0
        %1401 = vmatprep.subr.bf16.mxu0 0
        %1402 = vmatpush1.bf16.xpose.msra.mxu0 0
        %1403 = vmatprep.subr.bf16.mxu0 0
        %1404 = vmatpush1.bf16.xpose.msra.mxu0 0
        %1405 = vmatprep.subr.bf16.mxu0 0
        %1406 = vmatpush1.bf16.xpose.msra.mxu0 0
        %1407 = vmatprep.subr.bf16.mxu0 0
        %1408 = vmatpush1.bf16.xpose.msra.mxu0 0
        %1409 = vmatprep.subr.bf16.mxu0 0
        %1410 = vmatpush1.bf16.xpose.msra.mxu0 0
        %1411 = vmatprep.subr.bf16.mxu0 0
        %1412 = vmatpush1.bf16.xpose.msra.mxu0 0
        %1413 = vmatprep.subr.bf16.mxu0 0
        %1414 = vmatpush1.bf16.xpose.msra.mxu0 0
        %1415 = vmatprep.subr.bf16.mxu0 0
        %1416 = vmatpush1.bf16.xpose.msra.mxu0 0
        %1417 = vmatprep.subr.bf16.mxu0 0
        %1418 = vmatpush1.bf16.xpose.msra.mxu0 0
        %1419 = vmatprep.subr.bf16.mxu0 0
        %1420 = vmatpush1.bf16.xpose.msra.mxu0 0
        %1421 = vmatprep.subr.bf16.mxu0 0
        %1422 = vmatpush1.bf16.xpose.msra.mxu0 0
        %1423 = vmatprep.subr.bf16.mxu0 0
        %1424 = vmatpush1.bf16.xpose.msra.mxu0 0
        %1425 = vmatprep.mubr.bf16.mxu0 0
        %1426 = vmatmul.mubr.bf16.gmra.mrb[0].mxu0 %v1388
        %v1427 = vpop.f32.mrb[0].mxu0
        %v1428 = vadd.f32 0.0, %v1427
        %v1429 = vpop.f32.mrb[0].mxu0
        %v1430 = vpop.f32.mrb[0].mxu0
        %v1431 = vpop.f32.mrb[0].mxu0
        %1432 = vdwg.mxu0
        %v1433 = vsel %vm900, %v1428, -inf
        %1434 = vmax.xlane.f32.xlu0 %v1433
        %v1435 = vpop.xlane.xlu0 %1434
        %v1436 = vsub.f32 %v1428, %v1435
        %v1437 = vmul.f32 %v1436, 1.442695
        %v1438 = vpow.pop %v1437
        %v1439 = vsel %vm900, %v1438, 0.0
        %1440 = vadd.xlane.f32.xlu0 %v1439
        %v1441 = vpop.xlane.xlu0 %1440
        %v1442 = vrcp.pop %v1441
        %v1443 = vmul.f32 %v1438, %v1442
        %v1444 = vpack.c.bf16 %v1443, %v1443
        %s1445 = scalar_lea.vmem %s747, 12 [#allocation21]
        %1446 = vst.msk [vmem:[%s1445] sm:$0xf] %vm959, %v1444
        %1447 = vrot.lane.b32.xlu0 %v899, 72
        %v1448 = vpop.permute.xlu0 %1447
        %v1450 = vsel %vm900, %v1444, 0
        %v1453 = vsel %vm967, %v1448, 0
        %1455 = vmatprep.subr.bf16.mxu0 0
        %1456 = vmatpush1.bf16.msra.mxu0 %v1453
        %1457 = vmatprep.subr.bf16.mxu0 0
        %1458 = vmatpush1.bf16.msra.mxu0 0
        %1459 = vmatprep.subr.bf16.mxu0 0
        %1460 = vmatpush1.bf16.msra.mxu0 0
        %1461 = vmatprep.subr.bf16.mxu0 0
        %1462 = vmatpush1.bf16.msra.mxu0 0
        %1463 = vmatprep.subr.bf16.mxu0 0
        %1464 = vmatpush1.bf16.msra.mxu0 0
        %1465 = vmatprep.subr.bf16.mxu0 0
        %1466 = vmatpush1.bf16.msra.mxu0 0
        %1467 = vmatprep.subr.bf16.mxu0 0
        %1468 = vmatpush1.bf16.msra.mxu0 0
        %1469 = vmatprep.subr.bf16.mxu0 0
        %1470 = vmatpush1.bf16.msra.mxu0 0
        %1471 = vmatprep.subr.bf16.mxu0 0
        %1472 = vmatpush1.bf16.msra.mxu0 0
        %1473 = vmatprep.subr.bf16.mxu0 0
        %1474 = vmatpush1.bf16.msra.mxu0 0
        %1475 = vmatprep.subr.bf16.mxu0 0
        %1476 = vmatpush1.bf16.msra.mxu0 0
        %1477 = vmatprep.subr.bf16.mxu0 0
        %1478 = vmatpush1.bf16.msra.mxu0 0
        %1479 = vmatprep.subr.bf16.mxu0 0
        %1480 = vmatpush1.bf16.msra.mxu0 0
        %1481 = vmatprep.subr.bf16.mxu0 0
        %1482 = vmatpush1.bf16.msra.mxu0 0
        %1483 = vmatprep.subr.bf16.mxu0 0
        %1484 = vmatpush1.bf16.msra.mxu0 0
        %1485 = vmatprep.subr.bf16.mxu0 0
        %1486 = vmatpush1.bf16.msra.mxu0 0
        %1487 = vmatprep.mubr.bf16.mxu0 0
        %1488 = vmatmul.mubr.bf16.gmra.mrb[0].mxu0 %v1450
        %v1489 = vpop.f32.mrb[0].mxu0
        %v1490 = vadd.f32 0.0, %v1489
        %v1491 = vpop.f32.mrb[0].mxu0
        %v1492 = vpop.f32.mrb[0].mxu0
        %v1493 = vpop.f32.mrb[0].mxu0
        %1494 = vdwg.mxu0
        %v1495 = vpack.c.bf16 %v1490, %v1490
        %s1496 = scalar_lea.vmem [#allocation7], 12
        %v1497 = vld [vmem:[%s1496] sm:$0xf]
        %v1499 = vsel %vm900, %v1495, 0
        %v1502 = vsel %vm967, %v1497, 0
        %1504 = vmatprep.subr.bf16.mxu0 0
        %1505 = vmatpush1.bf16.msra.mxu0 %v1502
        %1506 = vmatprep.subr.bf16.mxu0 0
        %1507 = vmatpush1.bf16.msra.mxu0 0
        %1508 = vmatprep.subr.bf16.mxu0 0
        %1509 = vmatpush1.bf16.msra.mxu0 0
        %1510 = vmatprep.subr.bf16.mxu0 0
        %1511 = vmatpush1.bf16.msra.mxu0 0
        %1512 = vmatprep.subr.bf16.mxu0 0
        %1513 = vmatpush1.bf16.msra.mxu0 0
        %1514 = vmatprep.subr.bf16.mxu0 0
        %1515 = vmatpush1.bf16.msra.mxu0 0
        %1516 = vmatprep.subr.bf16.mxu0 0
        %1517 = vmatpush1.bf16.msra.mxu0 0
        %1518 = vmatprep.subr.bf16.mxu0 0
        %1519 = vmatpush1.bf16.msra.mxu0 0
        %1520 = vmatprep.subr.bf16.mxu0 0
        %1521 = vmatpush1.bf16.msra.mxu0 0
        %1522 = vmatprep.subr.bf16.mxu0 0
        %1523 = vmatpush1.bf16.msra.mxu0 0
        %1524 = vmatprep.subr.bf16.mxu0 0
        %1525 = vmatpush1.bf16.msra.mxu0 0
        %1526 = vmatprep.subr.bf16.mxu0 0
        %1527 = vmatpush1.bf16.msra.mxu0 0
        %1528 = vmatprep.subr.bf16.mxu0 0
        %1529 = vmatpush1.bf16.msra.mxu0 0
        %1530 = vmatprep.subr.bf16.mxu0 0
        %1531 = vmatpush1.bf16.msra.mxu0 0
        %1532 = vmatprep.subr.bf16.mxu0 0
        %1533 = vmatpush1.bf16.msra.mxu0 0
        %1534 = vmatprep.subr.bf16.mxu0 0
        %1535 = vmatpush1.bf16.msra.mxu0 0
        %1536 = vmatprep.mubr.bf16.mxu0 0
        %1537 = vmatmul.mubr.bf16.gmra.mrb[0].mxu0 %v1499
        %v1538 = vpop.f32.mrb[0].mxu0
        %v1539 = vadd.f32 0.0, %v1538
        %v1540 = vpop.f32.mrb[0].mxu0
        %v1541 = vpop.f32.mrb[0].mxu0
        %v1542 = vpop.f32.mrb[0].mxu0
        %1543 = vdwg.mxu0
        %v1544 = vadd.f32 %v1382, %v1539
        %v1545 = vld [vmem:[#allocation8] sm:$0x1]
        %v1547 = vlaneseq
        %v1548 = vshrl.u32 %v1547, 7
        %v1549 = vsub.s32 0, %v1548
        %v1550 = vrot.slane %v1545, %v1549
        %v1552 = vadd.f32 %v1544, %v1550
        %v1553 = vadd.f32 %v1552, %v761
        %v1554 = vld [vmem:[#allocation10] sm:$0x1]
        %v1555 = vld [vmem:[#allocation11] sm:$0x1]
        %v1556 = vsel %vm787, %v1553, 0.0
        %1557 = vadd.xlane.f32.xlu0 %v1556
        %v1558 = vpop.xlane.xlu0 %1557
        %v1559 = vrcp.pop 32.0
        %v1560 = vmul.f32 %v1558, %v1559
        %v1561 = vsub.f32 %v1553, %v1560
        %v1562 = vmul.f32 %v1561, %v1561
        %v1563 = vsel %vm787, %v1562, 0.0
        %1564 = vadd.xlane.f32.xlu0 %v1563
        %v1565 = vpop.xlane.xlu0 %1564
        %v1566 = vmul.f32 %v1565, %v1559
        %v1567 = vadd.f32 %v1566, 1e-05
        %v1568 = vrsqrt.pop %v1567
        %v1569 = vmul.f32 %v1561, %v1568
        %v1571 = vlaneseq
        %v1572 = vshrl.u32 %v1571, 7
        %v1573 = vsub.s32 0, %v1572
        %v1574 = vrot.slane %v1554, %v1573
        %v1576 = vmul.f32 %v1569, %v1574
        %v1578 = vlaneseq
        %v1579 = vshrl.u32 %v1578, 7
        %v1580 = vsub.s32 0, %v1579
        %v1581 = vrot.slane %v1555, %v1580
        %v1583 = vadd.f32 %v1576, %v1581
        %v1584 = vld [vmem:[%s759] sm:$0xff]
        %1586 = vset.pattern.permute.xlu0 0
        %1587 = vperm.xlu0 %1586, %v1584
        %v1588 = vpop.permute.xlu0 %1587
        %v1590 = vmul.f32 %v1583, %v1588
        %v1591 = vpack.c.bf16 %v1590, %v1590
        %v1592 = vld [vmem:[#allocation13] sm:$0xf]
        %v1593 = vld [vmem:[#allocation13 + $0x4] sm:$0xf]
        %v1594 = vld [vmem:[#allocation13 + $0x8] sm:$0xf]
        %v1595 = vld [vmem:[#allocation13 + $0xc] sm:$0xf]
        %v1596 = vld [vmem:[#allocation14] sm:$0x1]
        %v1598 = vlaneseq
        %v1599 = vshrl.u32 %v1598, 7
        %v1600 = vsub.s32 0, %v1599
        %v1601 = vrot.slane %v1596, %v1600
        %v1607 = vunpack.c.l.b16 %v1592
        %v1608 = vunpack.c.l.b16 %v1593
        %v1609 = vunpack.c.l.b16 %v1594
        %v1610 = vunpack.c.l.b16 %v1595
        %v1611 = vpack.c.b16 %v1608, %v1607
        %v1612 = vpack.c.b16 %v1610, %v1609
        %v1616 = vsel %vm787, %v1591, 0
        %1618 = vmatprep.subr.bf16.mxu0 0
        %1619 = vmatpush1.bf16.msra.mxu0 %v1611
        %1620 = vmatprep.subr.bf16.mxu0 0
        %1621 = vmatpush1.bf16.msra.mxu0 %v1612
        %1622 = vmatprep.subr.bf16.mxu0 0
        %1623 = vmatpush1.bf16.msra.mxu0 0
        %1624 = vmatprep.subr.bf16.mxu0 0
        %1625 = vmatpush1.bf16.msra.mxu0 0
        %1626 = vmatprep.subr.bf16.mxu0 0
        %1627 = vmatpush1.bf16.msra.mxu0 0
        %1628 = vmatprep.subr.bf16.mxu0 0
        %1629 = vmatpush1.bf16.msra.mxu0 0
        %1630 = vmatprep.subr.bf16.mxu0 0
        %1631 = vmatpush1.bf16.msra.mxu0 0
        %1632 = vmatprep.subr.bf16.mxu0 0
        %1633 = vmatpush1.bf16.msra.mxu0 0
        %1634 = vmatprep.subr.bf16.mxu0 0
        %1635 = vmatpush1.bf16.msra.mxu0 0
        %1636 = vmatprep.subr.bf16.mxu0 0
        %1637 = vmatpush1.bf16.msra.mxu0 0
        %1638 = vmatprep.subr.bf16.mxu0 0
        %1639 = vmatpush1.bf16.msra.mxu0 0
        %1640 = vmatprep.subr.bf16.mxu0 0
        %1641 = vmatpush1.bf16.msra.mxu0 0
        %1642 = vmatprep.subr.bf16.mxu0 0
        %1643 = vmatpush1.bf16.msra.mxu0 0
        %1644 = vmatprep.subr.bf16.mxu0 0
        %1645 = vmatpush1.bf16.msra.mxu0 0
        %1646 = vmatprep.subr.bf16.mxu0 0
        %1647 = vmatpush1.bf16.msra.mxu0 0
        %1648 = vmatprep.subr.bf16.mxu0 0
        %1649 = vmatpush1.bf16.msra.mxu0 0
        %1650 = vmatprep.mubr.bf16.mxu0 0
        %1651 = vmatmul.mubr.bf16.gmra.mrb[0].mxu0 %v1616
        %v1652 = vpop.f32.mrb[0].mxu0
        %v1653 = vadd.f32 %v1601, %v1652
        %v1654 = vpop.f32.mrb[0].mxu0
        %v1655 = vpop.f32.mrb[0].mxu0
        %v1656 = vpop.f32.mrb[0].mxu0
        %1657 = vdwg.mxu0
        %v1658 = vmax.f32 %v1653, 0.0
        %v1659 = vpack.c.bf16 %v1658, %v1658
        %v1660 = vld [vmem:[#allocation16] sm:$0xf]
        %v1661 = vld [vmem:[#allocation16 + $0x4] sm:$0xf]
        %v1662 = vld [vmem:[#allocation16 + $0x8] sm:$0xf]
        %v1663 = vld [vmem:[#allocation16 + $0xc] sm:$0xf]
        %v1664 = vld [vmem:[#allocation17] sm:$0x1]
        %v1666 = vlaneseq
        %v1667 = vshrl.u32 %v1666, 7
        %v1668 = vsub.s32 0, %v1667
        %v1669 = vrot.slane %v1664, %v1668
        %v1675 = vunpack.c.l.b16 %v1660
        %v1676 = vunpack.c.l.b16 %v1661
        %v1677 = vunpack.c.l.b16 %v1662
        %v1678 = vunpack.c.l.b16 %v1663
        %v1679 = vpack.c.b16 %v1676, %v1675
        %v1680 = vpack.c.b16 %v1678, %v1677
        %v1684 = vsel %vm787, %v1659, 0
        %1686 = vmatprep.subr.bf16.mxu0 0
        %1687 = vmatpush1.bf16.msra.mxu0 %v1679
        %1688 = vmatprep.subr.bf16.mxu0 0
        %1689 = vmatpush1.bf16.msra.mxu0 %v1680
        %1690 = vmatprep.subr.bf16.mxu0 0
        %1691 = vmatpush1.bf16.msra.mxu0 0
        %1692 = vmatprep.subr.bf16.mxu0 0
        %1693 = vmatpush1.bf16.msra.mxu0 0
        %1694 = vmatprep.subr.bf16.mxu0 0
        %1695 = vmatpush1.bf16.msra.mxu0 0
        %1696 = vmatprep.subr.bf16.mxu0 0
        %1697 = vmatpush1.bf16.msra.mxu0 0
        %1698 = vmatprep.subr.bf16.mxu0 0
        %1699 = vmatpush1.bf16.msra.mxu0 0
        %1700 = vmatprep.subr.bf16.mxu0 0
        %1701 = vmatpush1.bf16.msra.mxu0 0
        %1702 = vmatprep.subr.bf16.mxu0 0
        %1703 = vmatpush1.bf16.msra.mxu0 0
        %1704 = vmatprep.subr.bf16.mxu0 0
        %1705 = vmatpush1.bf16.msra.mxu0 0
        %1706 = vmatprep.subr.bf16.mxu0 0
        %1707 = vmatpush1.bf16.msra.mxu0 0
        %1708 = vmatprep.subr.bf16.mxu0 0
        %1709 = vmatpush1.bf16.msra.mxu0 0
        %1710 = vmatprep.subr.bf16.mxu0 0
        %1711 = vmatpush1.bf16.msra.mxu0 0
        %1712 = vmatprep.subr.bf16.mxu0 0
        %1713 = vmatpush1.bf16.msra.mxu0 0
        %1714 = vmatprep.subr.bf16.mxu0 0
        %1715 = vmatpush1.bf16.msra.mxu0 0
        %1716 = vmatprep.subr.bf16.mxu0 0
        %1717 = vmatpush1.bf16.msra.mxu0 0
        %1718 = vmatprep.mubr.bf16.mxu0 0
        %1719 = vmatmul.mubr.bf16.gmra.mrb[0].mxu0 %v1684
        %v1720 = vpop.f32.mrb[0].mxu0
        %v1721 = vadd.f32 %v1669, %v1720
        %v1722 = vpop.f32.mrb[0].mxu0
        %v1723 = vpop.f32.mrb[0].mxu0
        %v1724 = vpop.f32.mrb[0].mxu0
        %1725 = vdwg.mxu0
        %v1726 = vadd.f32 %v1721, %v1590
        %v1727 = vld [vmem:[%s15] sm:$0x1]
        %v1728 = vld [vmem:[#allocation19] sm:$0x1]
        %v1729 = vsel %vm787, %v1726, 0.0
        %1730 = vadd.xlane.f32.xlu0 %v1729
        %v1731 = vpop.xlane.xlu0 %1730
        %v1732 = vmul.f32 %v1731, %v1559
        %v1733 = vsub.f32 %v1726, %v1732
        %v1734 = vmul.f32 %v1733, %v1733
        %v1735 = vsel %vm787, %v1734, 0.0
        %1736 = vadd.xlane.f32.xlu0 %v1735
        %v1737 = vpop.xlane.xlu0 %1736
        %v1738 = vmul.f32 %v1737, %v1559
        %v1739 = vadd.f32 %v1738, 1e-05
        %v1740 = vrsqrt.pop %v1739
        %v1741 = vmul.f32 %v1733, %v1740
        %v1743 = vlaneseq
        %v1744 = vshrl.u32 %v1743, 7
        %v1745 = vsub.s32 0, %v1744
        %v1746 = vrot.slane %v1727, %v1745
        %v1748 = vmul.f32 %v1741, %v1746
        %v1750 = vlaneseq
        %v1751 = vshrl.u32 %v1750, 7
        %v1752 = vsub.s32 0, %v1751
        %v1753 = vrot.slane %v1728, %v1752
        %v1755 = vadd.f32 %v1748, %v1753
        %v1756 = vmul.f32 %v1755, %v1588
        %1757 = vst.msk [vmem:[%s740] sm:$0xff] %vm787, %v1756
        %s1758 = sand.u32 %s422, 1
        %s1759 = scalar_lea.sflag [#allocation4], %s1758
        %s1760 = sand.u32 %s422, 1
        %s1761 = smul.addr %s1760, 8
        %s1762 = scalar_lea.vmem [#allocation20], %s1761
        %s1763 = sand.u32 %s448, 1
        %s1764 = scalar_lea.sflag [#allocation22], %s1763
        %s1765 = sand.u32 %s448, 1
        %s1766 = smul.addr %s1765, 16
        %s1767 = scalar_lea.vmem [#allocation21], %s1766
        // Predicated region
        $region133: #{cross_decoder_layer.1} parent=87 // pred_check
          %p1768 = pneg %p432
        $region134: #{cross_decoder_layer.1} parent=87 // pred_check_branch
          %1770 = sbr.rel (%p1768) target = $region136
        $region135: #{cross_decoder_layer.1} parent=87 // pred_region
          %s1772 = ssub.s32 128, 128
          %1773 = vsyncadd %s1759, %s1772
          %s1774 = smul.addr %s42, 128
          %s1775 = scalar_lea.hbm %s17, %s1774
          %s1777 = sshll.u32 %s1762, 4
          %s1778 = int_to_ptr.vmem [resolvable:$true] %s1777
          %1780 = dma.vmem_to_hbm [thread:$0]  %s1778, 128, %s1775, %s1759
        $region136: #{cross_decoder_layer.1} parent=87 // pred_fallthru
          _
        // Predicated region
        $region137: #{cross_decoder_layer.1} parent=87 // pred_check
          %p1781 = pneg %p458
        $region138: #{cross_decoder_layer.1} parent=87 // pred_check_branch
          %1783 = sbr.rel (%p1781) target = $region140
        $region139: #{cross_decoder_layer.1} parent=87 // pred_region
          %s1785 = ssub.s32 256, 256
          %1786 = vsyncadd %s1764, %s1785
          %s1787 = smul.addr %s42, 64
          %s1788 = scalar_lea.hbm %s18, %s1787
          %s1789 = sshll.u32 %s1767, 4
          %s1790 = int_to_ptr.vmem [resolvable:$true] %s1789
          %1795 = dma.vmem_to_hbm [thread:$0]  %s1790, 256, %s1788, %s1764, 64, 128, 4
        $region140: #{cross_decoder_layer.1} parent=87 // pred_fallthru
          _
      $region88: #{cross_decoder_layer.1} parent=5 // pred_fallthru
        _
      %p1796 = scmp.le.s32.totalorder 2, %s37
      // Predicated region
      $region141: #{cross_decoder_layer.1} parent=5 // pred_check
        %p1797 = pneg %p1796
      $region142: #{cross_decoder_layer.1} parent=5 // pred_check_branch
        %1799 = sbr.rel (%p1797) target = $region144
      $region143: #{cross_decoder_layer.1} parent=5 // pred_region
        %s1800 = ssub.s32 %s37, 2
        // Predicated region
        $region145: #{cross_decoder_layer.1} parent=143 // pred_check
          %p1801 = pneg %p438
        $region146: #{cross_decoder_layer.1} parent=143 // pred_check_branch
          %1803 = sbr.rel (%p1801) target = $region148
        $region147: #{cross_decoder_layer.1} parent=143 // pred_region
          %s1804 = sand.u32 %s423, 1
          %s1805 = scalar_lea.sflag [#allocation4], %s1804
          %s1806 = sand.u32 %s423, 1
          %s1807 = smul.addr %s1806, 8
          %s1808 = scalar_lea.vmem [#allocation20], %s1807
          %1809 = dma.done %s1805, 128
        $region148: #{cross_decoder_layer.1} parent=143 // pred_fallthru
          _
        // Predicated region
        $region149: #{cross_decoder_layer.1} parent=143 // pred_check
          %p1810 = pneg %p464
        $region150: #{cross_decoder_layer.1} parent=143 // pred_check_branch
          %1812 = sbr.rel (%p1810) target = $region152
        $region151: #{cross_decoder_layer.1} parent=143 // pred_region
          %s1813 = sand.u32 %s449, 1
          %s1814 = scalar_lea.sflag [#allocation22], %s1813
          %s1815 = sand.u32 %s449, 1
          %s1816 = smul.addr %s1815, 16
          %s1817 = scalar_lea.vmem [#allocation21], %s1816
          %1818 = dma.done %s1814, 256
        $region152: #{cross_decoder_layer.1} parent=143 // pred_fallthru
          _
      $region144: #{cross_decoder_layer.1} parent=5 // pred_fallthru
        _
    $region6: #{cross_decoder_layer.1} parent=1 // loop_footer
      %s41 = sadd.s32 1, %s37
    $region7: #{cross_decoder_layer.1} parent=1 // loop_footer_branch
      %36 = sbr.rel target = $region3
    $region8: #{cross_decoder_layer.1} parent=1 // loop_exit
      _
    %1819 = vsyncpa [#allocation3], 1
    %s1820 = scalar_lea.sflag [#allocation3], 1
    %1821 = vsyncpa %s1820, 1
    %1822 = vsyncpa [#allocation6], 1
    %1823 = vsyncpa [#allocation9], 1
    %1824 = vsyncpa [#allocation12], 1
    %1825 = vsyncpa [#allocation15], 1
    %1826 = vsyncpa [#allocation18], 1
    %1827 = vsyncpa [#allocation4], 1
    %s1828 = scalar_lea.sflag [#allocation4], 1
    %1829 = vsyncpa %s1828, 1
    %1830 = vsyncpa [#allocation22], 1
    %s1831 = scalar_lea.sflag [#allocation22], 1
    %1832 = vsyncpa %s1831, 1

</llo_original>
